<compile_context>
chip_gen: v6e
topology: v6e:2x2x1
jax: 0.10.0
libtpu: 0.0.40
codegen_flags: <defaults>
</compile_context>

<pallas_src>
import jax
import jax.numpy as jnp
import numpy as np
from jax import lax
from jax.experimental import pallas as pl
from jax.experimental.pallas import tpu as pltpu

TAG_PAD = 128       # lane-dense padded tag dimension
NEG_BIG = -1e9      # "-inf" surrogate that is safe under (x * 0) and exp()


# ------------------------------ fused Pallas kernel ------------------------------

def fused_crf_kernel(x_ref, w1_ref, b1_ref, w2_ref, b2_ref,
                     start_ref, end_ref, trans_ref,
                     tags_ref, prev_ref, stepmask_ref, last_ref, len_ref,
                     em_ref, loss_ref):
    """Fused mid_linear + classifier + CRF mean NLL (torchcrf, reduction='mean', * -1).

    x_ref        : (S*B, H)  f32   time-major hidden states (row = t*B + b)
    w1,b1,w2,b2  : mid_linear / classifier weights (tag dim zero-padded to Tp)
    start,end    : (1, Tp)   f32   CRF start/end scores (-1e9 in pad columns)
    trans        : (Tp, Tp)  f32   CRF transitions (-1e9 in pad rows/cols)
    tags_ref     : (S*B, 1)  i32   gold tag per (t, b)
    prev_ref     : (S*B, 1)  i32   gold tag at (t-1, b) (t=0 rows are don't-care)
    stepmask_ref : (S*B, 1)  f32   mask[b, t] for t >= 1, 0 for t = 0
    last_ref     : (B, 1)    i32   gold tag at the last unmasked step of each sequence
    len_ref      : (B, 1)    i32   sequence lengths (mask is contiguous right-padding)
    em_ref       : (S*B, Tp) f32   output emissions (lane-dense)
    loss_ref     : (1, 1)    f32   SMEM scalar: -mean_b(llh_b)
    """
    SB, _ = x_ref.shape
    Tp = em_ref.shape[-1]
    B = len_ref.shape[0]
    S = SB // B

    # --- emissions: mid_linear (Linear + ReLU; Dropout = identity at eval) + classifier ---
    mid = jnp.dot(x_ref[...], w1_ref[...], preferred_element_type=jnp.float32) + b1_ref[...]
    mid = jnp.maximum(mid, 0.0)
    em = jnp.dot(mid, w2_ref[...], preferred_element_type=jnp.float32) + b2_ref[...]
    em_ref[...] = em                                            # (S*B, Tp), lane-dense store

    start = start_ref[...]                                      # (1, Tp)
    end = end_ref[...]                                          # (1, Tp)
    trans = trans_ref[...]                                      # (Tp, Tp)

    # --- numerator: gold-path score, summed over the batch (one-hots built in-kernel) ---
    lane = lax.broadcasted_iota(jnp.int32, (SB, Tp), 1)
    oh = (lane == tags_ref[...]).astype(jnp.float32)            # (S*B, Tp) gold one-hot
    oh_prev = (lane == prev_ref[...]).astype(jnp.float32)       # (S*B, Tp) prev-tag one-hot
    # per-row gold step score: trans[prev, tag] + em[row, tag], one multiply-reduce.
    step_sc = jnp.sum(
        (jnp.dot(oh_prev, trans, preferred_element_type=jnp.float32) + em) * oh,
        axis=-1, keepdims=True)                                 # (S*B, 1)
    # t = 0 head: start[tag] + em[0, tag]   (torchcrf assumes mask[:, 0] == 1)
    head_sc = jnp.sum((start + em[:B]) * oh[:B])
    lane_b = lax.broadcasted_iota(jnp.int32, (B, Tp), 1)
    oh_last = (lane_b == last_ref[...]).astype(jnp.float32)     # (B, Tp)
    num = (head_sc
           + jnp.sum(stepmask_ref[...] * step_sc)               # masked steps t >= 1
           + jnp.sum(end * oh_last))                            # end scores

    # --- denominator: log-partition via the forward algorithm (MXU log-space form) ---
    exp_trans = jnp.exp(trans)                                  # pad entries exp(-1e9) -> 0
    lengths = len_ref[...]                                      # (B, 1) i32
    alpha = start + em[:B]                                      # (B, Tp)
    for t in range(1, S):                                       # static S -> fully unrolled
        em_t = em[t * B:(t + 1) * B]                            # (B, Tp) static slice
        m = jnp.max(alpha, axis=-1, keepdims=True)              # (B, 1)
        p = jnp.exp(alpha - m)                                  # pads underflow to 0
        s = jnp.dot(p, exp_trans, preferred_element_type=jnp.float32)
        nxt = em_t + m + jnp.log(jnp.maximum(s, 1e-30))
        alpha = jnp.where(lengths > t, nxt, alpha)              # per-batch mask carry
    z = alpha + end                                             # (B, Tp)
    m2 = jnp.max(z, axis=-1, keepdims=True)
    denom = jnp.sum(m2) + jnp.sum(
        jnp.log(jnp.sum(jnp.exp(z - m2), axis=-1, keepdims=True)))

    loss_ref[0, 0] = -(num - denom) / B


# ------------------------------ wrapper (glue) ------------------------------

@jax.jit
def crf_model_forward(params, token_ids, attention_masks, token_type_ids, labels):
    """CRFModel.forward, labels-given / pseudo=None branch -> (tokens_loss, emissions)."""
    B, S = token_ids.shape
    T = params["crf_trans"].shape[0]
    Tp = TAG_PAD

    # TODO(synk): BertModel replaced with a deterministic embedding-sum encoder stub.
    # Hidden states are built directly in time-major order so the fused kernel needs no
    # transpose of any large activation tensor.
    tok_tm = token_ids.T                                        # (S, B)
    typ_tm = token_type_ids.T
    seq_out_tm = (params["word_emb"][tok_tm]
                  + params["type_emb"][typ_tm]
                  + params["pos_emb"][:S, None, :])             # (S, B, H)
    H = seq_out_tm.shape[-1]
    x2d = seq_out_tm.reshape(S * B, H).astype(jnp.float32)

    # Pad the tag axis to Tp=128 (lane-dense): zeros for the classifier, -1e9 for CRF params.
    w2p = jnp.zeros((params["w2"].shape[0], Tp), jnp.float32).at[:, :T].set(params["w2"])
    b2p = jnp.zeros((1, Tp), jnp.float32).at[:, :T].set(params["b2"].reshape(1, T))
    startp = jnp.full((1, Tp), NEG_BIG, jnp.float32).at[:, :T].set(
        params["crf_start"].reshape(1, T))
    endp = jnp.full((1, Tp), NEG_BIG, jnp.float32).at[:, :T].set(
        params["crf_end"].reshape(1, T))
    transp = jnp.full((Tp, Tp), NEG_BIG, jnp.float32).at[:T, :T].set(params["crf_trans"])

    # Tiny integer side-inputs (no HBM one-hot materialization).
    tags_tm = labels.T.astype(jnp.int32)                        # (S, B)
    prev_tm = jnp.concatenate([tags_tm[:1], tags_tm[:-1]], axis=0)
    mask_f = attention_masks.astype(jnp.float32)                # (B, S), contiguous right-pad
    stepmask_tm = mask_f.T.at[0].set(0.0)                       # (S, B): zero at t=0
    lengths = jnp.sum(mask_f, axis=1).astype(jnp.int32)         # (B,)
    last_tags = labels[jnp.arange(B), lengths - 1].astype(jnp.int32)

    vmem = pl.BlockSpec(memory_space=pltpu.MemorySpace.VMEM)
    smem = pl.BlockSpec(memory_space=pltpu.MemorySpace.SMEM)

    em2d, loss = pl.pallas_call(
        fused_crf_kernel,
        out_shape=(jax.ShapeDtypeStruct((S * B, Tp), jnp.float32),   # emissions (time-major)
                   jax.ShapeDtypeStruct((1, 1), jnp.float32)),       # scalar NLL in SMEM
        in_specs=[vmem] * 13,
        out_specs=(vmem, smem),
    )(x2d,
      params["w1"].astype(jnp.float32),
      params["b1"].reshape(1, -1).astype(jnp.float32),
      w2p, b2p, startp, endp, transp,
      tags_tm.reshape(S * B, 1),
      prev_tm.reshape(S * B, 1),
      stepmask_tm.reshape(S * B, 1),
      last_tags.reshape(B, 1),
      lengths.reshape(B, 1))

    # Batch-major un-padded emissions, returned only for inspection/verification.
    emissions = jnp.transpose(em2d.reshape(S, B, Tp)[:, :, :T], (1, 0, 2))
    return loss[0, 0], emissions


# ------------------------------ pure-JAX reference ------------------------------

def ref_forward(params, token_ids, attention_masks, token_type_ids, labels):
    B, S = token_ids.shape
    seq_out = (params["word_emb"][token_ids]
               + params["type_emb"][token_type_ids]
               + params["pos_emb"][None, :S, :])
    mid = jnp.maximum(seq_out @ params["w1"] + params["b1"][0], 0.0)
    em = mid @ params["w2"] + params["b2"][0]                              # (B, S, T)
    tags = labels
    mask = attention_masks.astype(jnp.float32)
    start, end, trans = params["crf_start"], params["crf_end"], params["crf_trans"]
    ar = jnp.arange(B)
    score = start[tags[:, 0]] + em[ar, 0, tags[:, 0]]
    for t in range(1, S):
        score = score + (trans[tags[:, t - 1], tags[:, t]] + em[ar, t, tags[:, t]]) * mask[:, t]
    seq_ends = mask.sum(1).astype(jnp.int32) - 1
    score = score + end[tags[ar, seq_ends]]
    alpha = start[None, :] + em[:, 0]
    for t in range(1, S):
        nxt = jax.nn.logsumexp(alpha[:, :, None] + trans[None] + em[:, t][:, None, :], axis=1)
        alpha = jnp.where(mask[:, t][:, None] > 0, nxt, alpha)
    denom = jax.nn.logsumexp(alpha + end[None], axis=-1)
    return -jnp.mean(score - denom), em


# ------------------------------ main ------------------------------

if __name__ == "__main__":
    B, S, H, MID, T, VOCAB, S_MAX = 2, 8, 32, 128, 8, 100, 16

    key = jax.random.PRNGKey(0)
    ks = jax.random.split(key, 12)

    params = {
        # encoder stub embeddings (BERT-style init, std=0.02)
        "word_emb": 0.02 * jax.random.normal(ks[0], (VOCAB, H), jnp.float32),
        "type_emb": 0.02 * jax.random.normal(ks[1], (2, H), jnp.float32),
        "pos_emb": 0.02 * jax.random.normal(ks[2], (S_MAX, H), jnp.float32),
        # mid_linear: Linear(H, MID) — bias zero-init per _init_weights
        "w1": 0.02 * jax.random.normal(ks[3], (H, MID), jnp.float32),
        "b1": jnp.zeros((1, MID), jnp.float32),
        # classifier: Linear(MID, T)
        "w2": 0.02 * jax.random.normal(ks[4], (MID, T), jnp.float32),
        "b2": jnp.zeros((1, T), jnp.float32),
        # CRF params (torchcrf inits uniform(-0.1, 0.1))
        "crf_start": jax.random.uniform(ks[5], (T,), jnp.float32, -0.1, 0.1),
        "crf_end": jax.random.uniform(ks[6], (T,), jnp.float32, -0.1, 0.1),
        "crf_trans": jax.random.uniform(ks[7], (T, T), jnp.float32, -0.1, 0.1),
        # loss_weight (unused on the pseudo=None path, kept for parity)
        "loss_weight": jnp.array([-0.2], jnp.float32),
    }

    token_ids = jax.random.randint(ks[8], (B, S), 0, VOCAB, jnp.int32)
    token_type_ids = jnp.zeros((B, S), jnp.int32)
    labels = jax.random.randint(ks[9], (B, S), 0, T, jnp.int32)
    lengths = jnp.array([S, S - 2], jnp.int32)                     # variable-length mask
    attention_masks = (jnp.arange(S)[None, :] < lengths[:, None]).astype(jnp.int32)

    loss, emissions = crf_model_forward(params, token_ids, attention_masks,
                                        token_type_ids, labels)
    loss = jax.block_until_ready(loss)
    emissions = jax.block_until_ready(emissions)

    ref_loss, ref_em = ref_forward(params, token_ids, attention_masks,
                                   token_type_ids, labels)
    assert np.allclose(np.asarray(emissions), np.asarray(ref_em), atol=1e-4), "emissions mismatch"
    assert np.allclose(np.asarray(loss), np.asarray(ref_loss), atol=1e-4), \
        f"loss mismatch: {loss} vs {ref_loss}"

    print("KERNEL_OK")
</pallas_src>

<mosaic_0001>
module attributes {stable_mosaic.version = 11 : i64} {
  func.func @fused_crf_kernel(%arg0: memref<16x32xf32, #tpu.memory_space<vmem>>, %arg1: memref<32x128xf32, #tpu.memory_space<vmem>>, %arg2: memref<1x128xf32, #tpu.memory_space<vmem>>, %arg3: memref<128x128xf32, #tpu.memory_space<vmem>>, %arg4: memref<1x128xf32, #tpu.memory_space<vmem>>, %arg5: memref<1x128xf32, #tpu.memory_space<vmem>>, %arg6: memref<1x128xf32, #tpu.memory_space<vmem>>, %arg7: memref<128x128xf32, #tpu.memory_space<vmem>>, %arg8: memref<16x1xi32, #tpu.memory_space<vmem>>, %arg9: memref<16x1xi32, #tpu.memory_space<vmem>>, %arg10: memref<16x1xf32, #tpu.memory_space<vmem>>, %arg11: memref<2x1xi32, #tpu.memory_space<vmem>>, %arg12: memref<2x1xi32, #tpu.memory_space<vmem>>, %arg13: memref<16x128xf32, #tpu.memory_space<vmem>>, %arg14: memref<1x1xf32, #tpu.memory_space<smem>>) attributes {dimension_semantics = [], scalar_prefetch = 0 : i64, scratch_operands = 0 : i64, tpu.core_type = #tpu.core_type<tc>} {
    %c0 = arith.constant 0 : index
    %c0_0 = arith.constant 0 : index
    %0 = vector.load %arg0[%c0, %c0_0] : memref<16x32xf32, #tpu.memory_space<vmem>>, vector<16x32xf32>
    %c0_1 = arith.constant 0 : index
    %c0_2 = arith.constant 0 : index
    %1 = vector.load %arg1[%c0_1, %c0_2] : memref<32x128xf32, #tpu.memory_space<vmem>>, vector<32x128xf32>
    %cst = arith.constant dense<0.000000e+00> : vector<16x128xf32>
    %2 = tpu.matmul %0, %1, %cst {dimension_numbers = #tpu.dot_dimension_numbers<[1], [0], [0], [1], [0, 0, 1, 1], [], []>} : vector<16x32xf32>, vector<32x128xf32>, vector<16x128xf32> -> vector<16x128xf32>
    %c0_3 = arith.constant 0 : index
    %c0_4 = arith.constant 0 : index
    %3 = vector.load %arg2[%c0_3, %c0_4] : memref<1x128xf32, #tpu.memory_space<vmem>>, vector<1x128xf32>
    %4 = vector.broadcast %3 : vector<1x128xf32> to vector<16x128xf32>
    %5 = arith.addf %2, %4 : vector<16x128xf32>
    %cst_5 = arith.constant 0.000000e+00 : f32
    %6 = vector.broadcast %cst_5 : f32 to vector<16x128xf32>
    %7 = arith.maximumf %5, %6 : vector<16x128xf32>
    %c0_6 = arith.constant 0 : index
    %c0_7 = arith.constant 0 : index
    %8 = vector.load %arg3[%c0_6, %c0_7] : memref<128x128xf32, #tpu.memory_space<vmem>>, vector<128x128xf32>
    %cst_8 = arith.constant dense<0.000000e+00> : vector<16x128xf32>
    %9 = tpu.matmul %7, %8, %cst_8 {dimension_numbers = #tpu.dot_dimension_numbers<[1], [0], [0], [1], [0, 0, 1, 1], [], []>} : vector<16x128xf32>, vector<128x128xf32>, vector<16x128xf32> -> vector<16x128xf32>
    %c0_9 = arith.constant 0 : index
    %c0_10 = arith.constant 0 : index
    %10 = vector.load %arg4[%c0_9, %c0_10] : memref<1x128xf32, #tpu.memory_space<vmem>>, vector<1x128xf32>
    %11 = vector.broadcast %10 : vector<1x128xf32> to vector<16x128xf32>
    %12 = arith.addf %9, %11 : vector<16x128xf32>
    %c0_11 = arith.constant 0 : index
    %c0_12 = arith.constant 0 : index
    %13 = vector.load %arg13[%c0_11, %c0_12] : memref<16x128xf32, #tpu.memory_space<vmem>>, vector<16x128xf32>
    tpu.vector_store %arg13[%c0_11, %c0_12], %12 {strides = array<i32>} : memref<16x128xf32, #tpu.memory_space<vmem>>, vector<16x128xf32>,
    %c0_13 = arith.constant 0 : index
    %c0_14 = arith.constant 0 : index
    %14 = vector.load %arg5[%c0_13, %c0_14] : memref<1x128xf32, #tpu.memory_space<vmem>>, vector<1x128xf32>
    %c0_15 = arith.constant 0 : index
    %c0_16 = arith.constant 0 : index
    %15 = vector.load %arg6[%c0_15, %c0_16] : memref<1x128xf32, #tpu.memory_space<vmem>>, vector<1x128xf32>
    %c0_17 = arith.constant 0 : index
    %c0_18 = arith.constant 0 : index
    %16 = vector.load %arg7[%c0_17, %c0_18] : memref<128x128xf32, #tpu.memory_space<vmem>>, vector<128x128xf32>
    %17 = tpu.iota {dimensions = array<i32: 1>} : vector<16x128xi32>
    %c0_19 = arith.constant 0 : index
    %c0_20 = arith.constant 0 : index
    %18 = vector.load %arg8[%c0_19, %c0_20] : memref<16x1xi32, #tpu.memory_space<vmem>>, vector<16x1xi32>
    %19 = vector.broadcast %18 : vector<16x1xi32> to vector<16x128xi32>
    %20 = arith.cmpi eq, %17, %19 : vector<16x128xi32>
    %21 = arith.extui %20 : vector<16x128xi1> to vector<16x128xi32>
    %22 = arith.sitofp %21 : vector<16x128xi32> to vector<16x128xf32>
    %c0_21 = arith.constant 0 : index
    %c0_22 = arith.constant 0 : index
    %23 = vector.load %arg9[%c0_21, %c0_22] : memref<16x1xi32, #tpu.memory_space<vmem>>, vector<16x1xi32>
    %24 = vector.broadcast %23 : vector<16x1xi32> to vector<16x128xi32>
    %25 = arith.cmpi eq, %17, %24 : vector<16x128xi32>
    %26 = arith.extui %25 : vector<16x128xi1> to vector<16x128xi32>
    %27 = arith.sitofp %26 : vector<16x128xi32> to vector<16x128xf32>
    %cst_23 = arith.constant dense<0.000000e+00> : vector<16x128xf32>
    %28 = tpu.matmul %27, %16, %cst_23 {dimension_numbers = #tpu.dot_dimension_numbers<[1], [0], [0], [1], [0, 0, 1, 1], [], []>} : vector<16x128xf32>, vector<128x128xf32>, vector<16x128xf32> -> vector<16x128xf32>
    %29 = arith.addf %28, %12 : vector<16x128xf32>
    %30 = arith.mulf %29, %22 : vector<16x128xf32>
    %cst_24 = arith.constant dense<0.000000e+00> : vector<16xf32>
    %31 = vector.multi_reduction <add>, %30, %cst_24 [1] : vector<16x128xf32> to vector<16xf32>
    %32 = vector.shape_cast %31 : vector<16xf32> to vector<16x1xf32>
    %33 = vector.extract_strided_slice %12 {offsets = [0, 0], sizes = [2, 128], strides = [1, 1]} : vector<16x128xf32> to vector<2x128xf32>
    %34 = vector.broadcast %14 : vector<1x128xf32> to vector<2x128xf32>
    %35 = arith.addf %34, %33 : vector<2x128xf32>
    %36 = vector.extract_strided_slice %22 {offsets = [0, 0], sizes = [2, 128], strides = [1, 1]} : vector<16x128xf32> to vector<2x128xf32>
    %37 = arith.mulf %35, %36 : vector<2x128xf32>
    %38 = vector.shape_cast %37 : vector<2x128xf32> to vector<1x2x128xf32>
    %cst_25 = arith.constant dense<0.000000e+00> : vector<1xf32>
    %39 = vector.multi_reduction <add>, %38, %cst_25 [1, 2] : vector<1x2x128xf32> to vector<1xf32>
    %40 = vector.shape_cast %39 : vector<1xf32> to vector<1x1x1xf32>
    %41 = vector.extract %40[0, 0, 0] : f32 from vector<1x1x1xf32>
    %42 = tpu.iota {dimensions = array<i32: 1>} : vector<2x128xi32>
    %c0_26 = arith.constant 0 : index
    %c0_27 = arith.constant 0 : index
    %43 = vector.load %arg11[%c0_26, %c0_27] : memref<2x1xi32, #tpu.memory_space<vmem>>, vector<2x1xi32>
    %44 = vector.broadcast %43 : vector<2x1xi32> to vector<2x128xi32>
    %45 = arith.cmpi eq, %42, %44 : vector<2x128xi32>
    %46 = arith.extui %45 : vector<2x128xi1> to vector<2x128xi32>
    %47 = arith.sitofp %46 : vector<2x128xi32> to vector<2x128xf32>
    %c0_28 = arith.constant 0 : index
    %c0_29 = arith.constant 0 : index
    %48 = vector.load %arg10[%c0_28, %c0_29] : memref<16x1xf32, #tpu.memory_space<vmem>>, vector<16x1xf32>
    %49 = arith.mulf %48, %32 : vector<16x1xf32>
    %50 = vector.shape_cast %49 : vector<16x1xf32> to vector<1x16x1xf32>
    %cst_30 = arith.constant dense<0.000000e+00> : vector<1xf32>
    %51 = vector.multi_reduction <add>, %50, %cst_30 [1, 2] : vector<1x16x1xf32> to vector<1xf32>
    %52 = vector.shape_cast %51 : vector<1xf32> to vector<1x1x1xf32>
    %53 = vector.extract %52[0, 0, 0] : f32 from vector<1x1x1xf32>
    %54 = arith.addf %41, %53 : f32
    %55 = vector.broadcast %15 : vector<1x128xf32> to vector<2x128xf32>
    %56 = arith.mulf %55, %47 : vector<2x128xf32>
    %57 = vector.shape_cast %56 : vector<2x128xf32> to vector<1x2x128xf32>
    %cst_31 = arith.constant dense<0.000000e+00> : vector<1xf32>
    %58 = vector.multi_reduction <add>, %57, %cst_31 [1, 2] : vector<1x2x128xf32> to vector<1xf32>
    %59 = vector.shape_cast %58 : vector<1xf32> to vector<1x1x1xf32>
    %60 = vector.extract %59[0, 0, 0] : f32 from vector<1x1x1xf32>
    %61 = arith.addf %54, %60 : f32
    %62 = math.exp %16 : vector<128x128xf32>
    %c0_32 = arith.constant 0 : index
    %c0_33 = arith.constant 0 : index
    %63 = vector.load %arg12[%c0_32, %c0_33] : memref<2x1xi32, #tpu.memory_space<vmem>>, vector<2x1xi32>
    %64 = vector.extract_strided_slice %12 {offsets = [0, 0], sizes = [2, 128], strides = [1, 1]} : vector<16x128xf32> to vector<2x128xf32>
    %65 = vector.broadcast %14 : vector<1x128xf32> to vector<2x128xf32>
    %66 = arith.addf %65, %64 : vector<2x128xf32>
    %67 = vector.extract_strided_slice %12 {offsets = [2, 0], sizes = [2, 128], strides = [1, 1]} : vector<16x128xf32> to vector<2x128xf32>
    %cst_34 = arith.constant dense<0xFF800000> : vector<2xf32>
    %68 = vector.multi_reduction <maximumf>, %66, %cst_34 [1] : vector<2x128xf32> to vector<2xf32>
    %69 = vector.shape_cast %68 : vector<2xf32> to vector<2x1xf32>
    %70 = vector.broadcast %69 : vector<2x1xf32> to vector<2x128xf32>
    %71 = arith.subf %66, %70 : vector<2x128xf32>
    %72 = math.exp %71 : vector<2x128xf32>
    %cst_35 = arith.constant dense<0.000000e+00> : vector<2x128xf32>
    %73 = tpu.matmul %72, %62, %cst_35 {dimension_numbers = #tpu.dot_dimension_numbers<[1], [0], [0], [1], [0, 0, 1, 1], [], []>} : vector<2x128xf32>, vector<128x128xf32>, vector<2x128xf32> -> vector<2x128xf32>
    %74 = vector.broadcast %69 : vector<2x1xf32> to vector<2x128xf32>
    %75 = arith.addf %67, %74 : vector<2x128xf32>
    %cst_36 = arith.constant 1.000000e-30 : f32
    %76 = vector.broadcast %cst_36 : f32 to vector<2x128xf32>
    %77 = arith.maximumf %73, %76 : vector<2x128xf32>
    %78 = math.log %77 : vector<2x128xf32>
    %79 = arith.addf %75, %78 : vector<2x128xf32>
    %c1_i32 = arith.constant 1 : i32
    %80 = vector.broadcast %c1_i32 : i32 to vector<2x1xi32>
    %81 = arith.cmpi sgt, %63, %80 : vector<2x1xi32>
    %82 = vector.shape_cast %81 : vector<2x1xi1> to vector<2x1xi1>
    %83 = vector.broadcast %82 : vector<2x1xi1> to vector<2x128xi1>
    %84 = arith.select %83, %79, %66 : vector<2x128xi1>, vector<2x128xf32>
    %85 = vector.extract_strided_slice %12 {offsets = [4, 0], sizes = [2, 128], strides = [1, 1]} : vector<16x128xf32> to vector<2x128xf32>
    %cst_37 = arith.constant dense<0xFF800000> : vector<2xf32>
    %86 = vector.multi_reduction <maximumf>, %84, %cst_37 [1] : vector<2x128xf32> to vector<2xf32>
    %87 = vector.shape_cast %86 : vector<2xf32> to vector<2x1xf32>
    %88 = vector.broadcast %87 : vector<2x1xf32> to vector<2x128xf32>
    %89 = arith.subf %84, %88 : vector<2x128xf32>
    %90 = math.exp %89 : vector<2x128xf32>
    %cst_38 = arith.constant dense<0.000000e+00> : vector<2x128xf32>
    %91 = tpu.matmul %90, %62, %cst_38 {dimension_numbers = #tpu.dot_dimension_numbers<[1], [0], [0], [1], [0, 0, 1, 1], [], []>} : vector<2x128xf32>, vector<128x128xf32>, vector<2x128xf32> -> vector<2x128xf32>
    %92 = vector.broadcast %87 : vector<2x1xf32> to vector<2x128xf32>
    %93 = arith.addf %85, %92 : vector<2x128xf32>
    %cst_39 = arith.constant 1.000000e-30 : f32
    %94 = vector.broadcast %cst_39 : f32 to vector<2x128xf32>
    %95 = arith.maximumf %91, %94 : vector<2x128xf32>
    %96 = math.log %95 : vector<2x128xf32>
    %97 = arith.addf %93, %96 : vector<2x128xf32>
    %c2_i32 = arith.constant 2 : i32
    %98 = vector.broadcast %c2_i32 : i32 to vector<2x1xi32>
    %99 = arith.cmpi sgt, %63, %98 : vector<2x1xi32>
    %100 = vector.shape_cast %99 : vector<2x1xi1> to vector<2x1xi1>
    %101 = vector.broadcast %100 : vector<2x1xi1> to vector<2x128xi1>
    %102 = arith.select %101, %97, %84 : vector<2x128xi1>, vector<2x128xf32>
    %103 = vector.extract_strided_slice %12 {offsets = [6, 0], sizes = [2, 128], strides = [1, 1]} : vector<16x128xf32> to vector<2x128xf32>
    %cst_40 = arith.constant dense<0xFF800000> : vector<2xf32>
    %104 = vector.multi_reduction <maximumf>, %102, %cst_40 [1] : vector<2x128xf32> to vector<2xf32>
    %105 = vector.shape_cast %104 : vector<2xf32> to vector<2x1xf32>
    %106 = vector.broadcast %105 : vector<2x1xf32> to vector<2x128xf32>
    %107 = arith.subf %102, %106 : vector<2x128xf32>
    %108 = math.exp %107 : vector<2x128xf32>
    %cst_41 = arith.constant dense<0.000000e+00> : vector<2x128xf32>
    %109 = tpu.matmul %108, %62, %cst_41 {dimension_numbers = #tpu.dot_dimension_numbers<[1], [0], [0], [1], [0, 0, 1, 1], [], []>} : vector<2x128xf32>, vector<128x128xf32>, vector<2x128xf32> -> vector<2x128xf32>
    %110 = vector.broadcast %105 : vector<2x1xf32> to vector<2x128xf32>
    %111 = arith.addf %103, %110 : vector<2x128xf32>
    %cst_42 = arith.constant 1.000000e-30 : f32
    %112 = vector.broadcast %cst_42 : f32 to vector<2x128xf32>
    %113 = arith.maximumf %109, %112 : vector<2x128xf32>
    %114 = math.log %113 : vector<2x128xf32>
    %115 = arith.addf %111, %114 : vector<2x128xf32>
    %c3_i32 = arith.constant 3 : i32
    %116 = vector.broadcast %c3_i32 : i32 to vector<2x1xi32>
    %117 = arith.cmpi sgt, %63, %116 : vector<2x1xi32>
    %118 = vector.shape_cast %117 : vector<2x1xi1> to vector<2x1xi1>
    %119 = vector.broadcast %118 : vector<2x1xi1> to vector<2x128xi1>
    %120 = arith.select %119, %115, %102 : vector<2x128xi1>, vector<2x128xf32>
    %121 = vector.extract_strided_slice %12 {offsets = [8, 0], sizes = [2, 128], strides = [1, 1]} : vector<16x128xf32> to vector<2x128xf32>
    %cst_43 = arith.constant dense<0xFF800000> : vector<2xf32>
    %122 = vector.multi_reduction <maximumf>, %120, %cst_43 [1] : vector<2x128xf32> to vector<2xf32>
    %123 = vector.shape_cast %122 : vector<2xf32> to vector<2x1xf32>
    %124 = vector.broadcast %123 : vector<2x1xf32> to vector<2x128xf32>
    %125 = arith.subf %120, %124 : vector<2x128xf32>
    %126 = math.exp %125 : vector<2x128xf32>
    %cst_44 = arith.constant dense<0.000000e+00> : vector<2x128xf32>
    %127 = tpu.matmul %126, %62, %cst_44 {dimension_numbers = #tpu.dot_dimension_numbers<[1], [0], [0], [1], [0, 0, 1, 1], [], []>} : vector<2x128xf32>, vector<128x128xf32>, vector<2x128xf32> -> vector<2x128xf32>
    %128 = vector.broadcast %123 : vector<2x1xf32> to vector<2x128xf32>
    %129 = arith.addf %121, %128 : vector<2x128xf32>
    %cst_45 = arith.constant 1.000000e-30 : f32
    %130 = vector.broadcast %cst_45 : f32 to vector<2x128xf32>
    %131 = arith.maximumf %127, %130 : vector<2x128xf32>
    %132 = math.log %131 : vector<2x128xf32>
    %133 = arith.addf %129, %132 : vector<2x128xf32>
    %c4_i32 = arith.constant 4 : i32
    %134 = vector.broadcast %c4_i32 : i32 to vector<2x1xi32>
    %135 = arith.cmpi sgt, %63, %134 : vector<2x1xi32>
    %136 = vector.shape_cast %135 : vector<2x1xi1> to vector<2x1xi1>
    %137 = vector.broadcast %136 : vector<2x1xi1> to vector<2x128xi1>
    %138 = arith.select %137, %133, %120 : vector<2x128xi1>, vector<2x128xf32>
    %139 = vector.extract_strided_slice %12 {offsets = [10, 0], sizes = [2, 128], strides = [1, 1]} : vector<16x128xf32> to vector<2x128xf32>
    %cst_46 = arith.constant dense<0xFF800000> : vector<2xf32>
    %140 = vector.multi_reduction <maximumf>, %138, %cst_46 [1] : vector<2x128xf32> to vector<2xf32>
    %141 = vector.shape_cast %140 : vector<2xf32> to vector<2x1xf32>
    %142 = vector.broadcast %141 : vector<2x1xf32> to vector<2x128xf32>
    %143 = arith.subf %138, %142 : vector<2x128xf32>
    %144 = math.exp %143 : vector<2x128xf32>
    %cst_47 = arith.constant dense<0.000000e+00> : vector<2x128xf32>
    %145 = tpu.matmul %144, %62, %cst_47 {dimension_numbers = #tpu.dot_dimension_numbers<[1], [0], [0], [1], [0, 0, 1, 1], [], []>} : vector<2x128xf32>, vector<128x128xf32>, vector<2x128xf32> -> vector<2x128xf32>
    %146 = vector.broadcast %141 : vector<2x1xf32> to vector<2x128xf32>
    %147 = arith.addf %139, %146 : vector<2x128xf32>
    %cst_48 = arith.constant 1.000000e-30 : f32
    %148 = vector.broadcast %cst_48 : f32 to vector<2x128xf32>
    %149 = arith.maximumf %145, %148 : vector<2x128xf32>
    %150 = math.log %149 : vector<2x128xf32>
    %151 = arith.addf %147, %150 : vector<2x128xf32>
    %c5_i32 = arith.constant 5 : i32
    %152 = vector.broadcast %c5_i32 : i32 to vector<2x1xi32>
    %153 = arith.cmpi sgt, %63, %152 : vector<2x1xi32>
    %154 = vector.shape_cast %153 : vector<2x1xi1> to vector<2x1xi1>
    %155 = vector.broadcast %154 : vector<2x1xi1> to vector<2x128xi1>
    %156 = arith.select %155, %151, %138 : vector<2x128xi1>, vector<2x128xf32>
    %157 = vector.extract_strided_slice %12 {offsets = [12, 0], sizes = [2, 128], strides = [1, 1]} : vector<16x128xf32> to vector<2x128xf32>
    %cst_49 = arith.constant dense<0xFF800000> : vector<2xf32>
    %158 = vector.multi_reduction <maximumf>, %156, %cst_49 [1] : vector<2x128xf32> to vector<2xf32>
    %159 = vector.shape_cast %158 : vector<2xf32> to vector<2x1xf32>
    %160 = vector.broadcast %159 : vector<2x1xf32> to vector<2x128xf32>
    %161 = arith.subf %156, %160 : vector<2x128xf32>
    %162 = math.exp %161 : vector<2x128xf32>
    %cst_50 = arith.constant dense<0.000000e+00> : vector<2x128xf32>
    %163 = tpu.matmul %162, %62, %cst_50 {dimension_numbers = #tpu.dot_dimension_numbers<[1], [0], [0], [1], [0, 0, 1, 1], [], []>} : vector<2x128xf32>, vector<128x128xf32>, vector<2x128xf32> -> vector<2x128xf32>
    %164 = vector.broadcast %159 : vector<2x1xf32> to vector<2x128xf32>
    %165 = arith.addf %157, %164 : vector<2x128xf32>
    %cst_51 = arith.constant 1.000000e-30 : f32
    %166 = vector.broadcast %cst_51 : f32 to vector<2x128xf32>
    %167 = arith.maximumf %163, %166 : vector<2x128xf32>
    %168 = math.log %167 : vector<2x128xf32>
    %169 = arith.addf %165, %168 : vector<2x128xf32>
    %c6_i32 = arith.constant 6 : i32
    %170 = vector.broadcast %c6_i32 : i32 to vector<2x1xi32>
    %171 = arith.cmpi sgt, %63, %170 : vector<2x1xi32>
    %172 = vector.shape_cast %171 : vector<2x1xi1> to vector<2x1xi1>
    %173 = vector.broadcast %172 : vector<2x1xi1> to vector<2x128xi1>
    %174 = arith.select %173, %169, %156 : vector<2x128xi1>, vector<2x128xf32>
    %175 = vector.extract_strided_slice %12 {offsets = [14, 0], sizes = [2, 128], strides = [1, 1]} : vector<16x128xf32> to vector<2x128xf32>
    %cst_52 = arith.constant dense<0xFF800000> : vector<2xf32>
    %176 = vector.multi_reduction <maximumf>, %174, %cst_52 [1] : vector<2x128xf32> to vector<2xf32>
    %177 = vector.shape_cast %176 : vector<2xf32> to vector<2x1xf32>
    %178 = vector.broadcast %177 : vector<2x1xf32> to vector<2x128xf32>
    %179 = arith.subf %174, %178 : vector<2x128xf32>
    %180 = math.exp %179 : vector<2x128xf32>
    %cst_53 = arith.constant dense<0.000000e+00> : vector<2x128xf32>
    %181 = tpu.matmul %180, %62, %cst_53 {dimension_numbers = #tpu.dot_dimension_numbers<[1], [0], [0], [1], [0, 0, 1, 1], [], []>} : vector<2x128xf32>, vector<128x128xf32>, vector<2x128xf32> -> vector<2x128xf32>
    %182 = vector.broadcast %177 : vector<2x1xf32> to vector<2x128xf32>
    %183 = arith.addf %175, %182 : vector<2x128xf32>
    %cst_54 = arith.constant 1.000000e-30 : f32
    %184 = vector.broadcast %cst_54 : f32 to vector<2x128xf32>
    %185 = arith.maximumf %181, %184 : vector<2x128xf32>
    %186 = math.log %185 : vector<2x128xf32>
    %187 = arith.addf %183, %186 : vector<2x128xf32>
    %c7_i32 = arith.constant 7 : i32
    %188 = vector.broadcast %c7_i32 : i32 to vector<2x1xi32>
    %189 = arith.cmpi sgt, %63, %188 : vector<2x1xi32>
    %190 = vector.shape_cast %189 : vector<2x1xi1> to vector<2x1xi1>
    %191 = vector.broadcast %190 : vector<2x1xi1> to vector<2x128xi1>
    %192 = arith.select %191, %187, %174 : vector<2x128xi1>, vector<2x128xf32>
    %193 = vector.broadcast %15 : vector<1x128xf32> to vector<2x128xf32>
    %194 = arith.addf %192, %193 : vector<2x128xf32>
    %cst_55 = arith.constant dense<0xFF800000> : vector<2xf32>
    %195 = vector.multi_reduction <maximumf>, %194, %cst_55 [1] : vector<2x128xf32> to vector<2xf32>
    %196 = vector.shape_cast %195 : vector<2xf32> to vector<2x1xf32>
    %197 = vector.shape_cast %196 : vector<2x1xf32> to vector<1x2x1xf32>
    %cst_56 = arith.constant dense<0.000000e+00> : vector<1xf32>
    %198 = vector.multi_reduction <add>, %197, %cst_56 [1, 2] : vector<1x2x1xf32> to vector<1xf32>
    %199 = vector.shape_cast %198 : vector<1xf32> to vector<1x1x1xf32>
    %200 = vector.extract %199[0, 0, 0] : f32 from vector<1x1x1xf32>
    %201 = vector.broadcast %196 : vector<2x1xf32> to vector<2x128xf32>
    %202 = arith.subf %194, %201 : vector<2x128xf32>
    %203 = math.exp %202 : vector<2x128xf32>
    %cst_57 = arith.constant dense<0.000000e+00> : vector<2xf32>
    %204 = vector.multi_reduction <add>, %203, %cst_57 [1] : vector<2x128xf32> to vector<2xf32>
    %205 = vector.shape_cast %204 : vector<2xf32> to vector<2x1xf32>
    %206 = math.log %205 : vector<2x1xf32>
    %207 = vector.shape_cast %206 : vector<2x1xf32> to vector<1x2x1xf32>
    %cst_58 = arith.constant dense<0.000000e+00> : vector<1xf32>
    %208 = vector.multi_reduction <add>, %207, %cst_58 [1, 2] : vector<1x2x1xf32> to vector<1xf32>
    %209 = vector.shape_cast %208 : vector<1xf32> to vector<1x1x1xf32>
    %210 = vector.extract %209[0, 0, 0] : f32 from vector<1x1x1xf32>
    %211 = arith.addf %200, %210 : f32
    %212 = arith.subf %61, %211 : f32
    %cst_59 = arith.constant 0.000000e+00 : f32
    %213 = arith.subf %cst_59, %212 : f32
    %cst_60 = arith.constant 2.000000e+00 : f32
    %214 = arith.divf %213, %cst_60 : f32
    %c0_61 = arith.constant 0 : index
    %c0_62 = arith.constant 0 : index
    %215 = memref.load %arg14[%c0_61, %c0_62] : memref<1x1xf32, #tpu.memory_space<smem>>
    memref.store %214, %arg14[%c0_61, %c0_62] : memref<1x1xf32, #tpu.memory_space<smem>>
    return
  }
}

</mosaic_0001>

<llo_original>
// kernel: crf_model_forward.1
$region0: #{crf_model_forward.1}
  #allocation0 [shape = 'u32[]', space=smem, size = 0x4, offset = 0x4, fixed_abs, tag = 'smem constant byte address 0x4 - core index']
  #allocation1 [shape = 'u32[144,128]{1,0:T(1,128)}', space=vmem, size = 0x12000, scoped, tag = 'internal scratch']
  %s0 = inlined_call_operand.vmem [shape: f32[16,32], index: 0, kind: input, shape index: {}]
  %s1 = inlined_call_operand.vmem [shape: f32[32,128], index: 1, kind: input, shape index: {}]
  %s2 = inlined_call_operand.vmem [shape: f32[1,128], index: 2, kind: input, shape index: {}]
  %s3 = inlined_call_operand.vmem [shape: f32[128,128], index: 3, kind: input, shape index: {}]
  %s4 = inlined_call_operand.vmem [shape: f32[1,128], index: 4, kind: input, shape index: {}]
  %s5 = inlined_call_operand.vmem [shape: f32[1,128], index: 5, kind: input, shape index: {}]
  %s6 = inlined_call_operand.vmem [shape: f32[1,128], index: 6, kind: input, shape index: {}]
  %s7 = inlined_call_operand.vmem [shape: f32[128,128], index: 7, kind: input, shape index: {}]
  %s8 = inlined_call_operand.vmem [shape: s32[16,1], index: 8, kind: input, shape index: {}]
  %s9 = inlined_call_operand.vmem [shape: s32[16,1], index: 9, kind: input, shape index: {}]
  %s10 = inlined_call_operand.vmem [shape: f32[16,1], index: 10, kind: input, shape index: {}]
  %s11 = inlined_call_operand.vmem [shape: s32[2,1], index: 11, kind: input, shape index: {}]
  %s12 = inlined_call_operand.vmem [shape: s32[2,1], index: 12, kind: input, shape index: {}]
  %s13 = inlined_call_operand.vmem [shape: f32[16,128], index: 13, kind: output, shape index: {0}]
  %s14 = inlined_call_operand.hbm [shape: f32[1,1], index: 14, kind: output, shape index: {1}]
  %15 = xla_tuple %s13, %s14
  %s16 = sld [smem:[#allocation0]]
  $region70: #{crf_model_forward.1} parent=0
    _
  %s18 = ssub.s32 1, %s16
  %s19 = scalar_select 0, %s18, %s16
  $region1: #{crf_model_forward.1} parent=0
    #allocation2 [shape = 'u8[512]{0}', space=smem, size = 0x200, scoped, tag = 'output window, operand 1, single buffered']
    #allocation3 [shape = 's32[1]{0}', space=sflag, size = 0x4, scoped, tag = 'scoped memory for crf_model_forward.1']
    %20 = vsyncpa [#allocation3], 0
    // Predicated region
    $region2: #{crf_model_forward.1} parent=1 // pred_check
      _
    $region3: #{crf_model_forward.1} parent=1 // pred_check_branch
      %22 = sbr.rel (0) target = $region5
    $region4: #{crf_model_forward.1} parent=1 // pred_region
      _
    $region5: #{crf_model_forward.1} parent=1 // pred_fallthru
      _
    // Predicated region
    $region6: #{crf_model_forward.1} parent=1 // pred_check
      _
    $region7: #{crf_model_forward.1} parent=1 // pred_check_branch
      %24 = sbr.rel (0) target = $region9
    $region8: #{crf_model_forward.1} parent=1 // pred_region
      _
    $region9: #{crf_model_forward.1} parent=1 // pred_fallthru
      _
    // Predicated region
    $region10: #{crf_model_forward.1} parent=1 // pred_check
      _
    $region11: #{crf_model_forward.1} parent=1 // pred_check_branch
      %26 = sbr.rel (0) target = $region13
    $region12: #{crf_model_forward.1} parent=1 // pred_region
      _
    $region13: #{crf_model_forward.1} parent=1 // pred_fallthru
      _
    // Predicated region
    $region14: #{crf_model_forward.1} parent=1 // pred_check
      _
    $region15: #{crf_model_forward.1} parent=1 // pred_check_branch
      %28 = sbr.rel (0) target = $region17
    $region16: #{crf_model_forward.1} parent=1 // pred_region
      _
    $region17: #{crf_model_forward.1} parent=1 // pred_fallthru
      _
    // Predicated region
    $region18: #{crf_model_forward.1} parent=1 // pred_check
      _
    $region19: #{crf_model_forward.1} parent=1 // pred_check_branch
      %30 = sbr.rel (0) target = $region21
    $region20: #{crf_model_forward.1} parent=1 // pred_region
      _
    $region21: #{crf_model_forward.1} parent=1 // pred_fallthru
      _
    // Predicated region
    $region22: #{crf_model_forward.1} parent=1 // pred_check
      _
    $region23: #{crf_model_forward.1} parent=1 // pred_check_branch
      %32 = sbr.rel (0) target = $region25
    $region24: #{crf_model_forward.1} parent=1 // pred_region
      _
    $region25: #{crf_model_forward.1} parent=1 // pred_fallthru
      _
    // Predicated region
    $region26: #{crf_model_forward.1} parent=1 // pred_check
      _
    $region27: #{crf_model_forward.1} parent=1 // pred_check_branch
      %34 = sbr.rel (0) target = $region29
    $region28: #{crf_model_forward.1} parent=1 // pred_region
      _
    $region29: #{crf_model_forward.1} parent=1 // pred_fallthru
      _
    // Predicated region
    $region30: #{crf_model_forward.1} parent=1 // pred_check
      _
    $region31: #{crf_model_forward.1} parent=1 // pred_check_branch
      %36 = sbr.rel (0) target = $region33
    $region32: #{crf_model_forward.1} parent=1 // pred_region
      _
    $region33: #{crf_model_forward.1} parent=1 // pred_fallthru
      _
    // Predicated region
    $region34: #{crf_model_forward.1} parent=1 // pred_check
      _
    $region35: #{crf_model_forward.1} parent=1 // pred_check_branch
      %38 = sbr.rel (0) target = $region37
    $region36: #{crf_model_forward.1} parent=1 // pred_region
      _
    $region37: #{crf_model_forward.1} parent=1 // pred_fallthru
      _
    // Predicated region
    $region38: #{crf_model_forward.1} parent=1 // pred_check
      _
    $region39: #{crf_model_forward.1} parent=1 // pred_check_branch
      %40 = sbr.rel (0) target = $region41
    $region40: #{crf_model_forward.1} parent=1 // pred_region
      _
    $region41: #{crf_model_forward.1} parent=1 // pred_fallthru
      _
    // Predicated region
    $region42: #{crf_model_forward.1} parent=1 // pred_check
      _
    $region43: #{crf_model_forward.1} parent=1 // pred_check_branch
      %42 = sbr.rel (0) target = $region45
    $region44: #{crf_model_forward.1} parent=1 // pred_region
      _
    $region45: #{crf_model_forward.1} parent=1 // pred_fallthru
      _
    // Predicated region
    $region46: #{crf_model_forward.1} parent=1 // pred_check
      _
    $region47: #{crf_model_forward.1} parent=1 // pred_check_branch
      %44 = sbr.rel (0) target = $region49
    $region48: #{crf_model_forward.1} parent=1 // pred_region
      _
    $region49: #{crf_model_forward.1} parent=1 // pred_fallthru
      _
    // Predicated region
    $region50: #{crf_model_forward.1} parent=1 // pred_check
      _
    $region51: #{crf_model_forward.1} parent=1 // pred_check_branch
      %46 = sbr.rel (0) target = $region53
    $region52: #{crf_model_forward.1} parent=1 // pred_region
      _
    $region53: #{crf_model_forward.1} parent=1 // pred_fallthru
      _
    %v47 = vld [vmem:[%s0] sm:$0xff]
    %v48 = vld [vmem:[%s0 + $0x8] sm:$0xff]
    %v49 = vld [vmem:[%s1] sm:$0xff]
    %v50 = vld [vmem:[%s1 + $0x8] sm:$0xff]
    %v51 = vld [vmem:[%s1 + $0x10] sm:$0xff]
    %v52 = vld [vmem:[%s1 + $0x18] sm:$0xff]
    %v53 = vld [vmem:[%s2] sm:$0x1]
    %v55 = vlaneseq
    %v56 = vshrl.u32 %v55, 7
    %v57 = vsub.s32 0, %v56
    %v58 = vrot.slane %v53, %v57
    %vm60 = vcmask 261120
    %v62 = vsel %vm60, %v47, 0
    %v65 = vsel %vm60, %v48, 0
    %67 = vmatprep.subr.mxu0 0.0
    %68 = vmatpush1.msra.mxu0 0.0
    %69 = vmatprep.subr.mxu0 0.0
    %70 = vmatpush1.msra.mxu0 0.0
    %71 = vmatprep.subr.mxu0 0.0
    %72 = vmatpush1.msra.mxu0 0.0
    %73 = vmatprep.subr.mxu0 0.0
    %74 = vmatpush1.msra.mxu0 0.0
    %75 = vmatprep.subr.mxu0 0.0
    %76 = vmatpush1.msra.mxu0 0.0
    %77 = vmatprep.subr.mxu0 0.0
    %78 = vmatpush1.msra.mxu0 0.0
    %79 = vmatprep.subr.mxu0 0.0
    %80 = vmatpush1.msra.mxu0 0.0
    %81 = vmatprep.subr.mxu0 0.0
    %82 = vmatpush1.msra.mxu0 0.0
    %83 = vmatprep.subr.mxu0 0.0
    %84 = vmatpush1.msra.mxu0 0.0
    %85 = vmatprep.subr.mxu0 0.0
    %86 = vmatpush1.msra.mxu0 0.0
    %87 = vmatprep.subr.mxu0 0.0
    %88 = vmatpush1.msra.mxu0 0.0
    %89 = vmatprep.subr.mxu0 0.0
    %90 = vmatpush1.msra.mxu0 0.0
    %91 = vmatprep.subr.mxu0 0.0
    %92 = vmatpush1.msra.mxu0 %v52
    %93 = vmatprep.subr.mxu0 0.0
    %94 = vmatpush1.msra.mxu0 %v51
    %95 = vmatprep.subr.mxu0 0.0
    %96 = vmatpush1.msra.mxu0 %v50
    %97 = vmatprep.subr.mxu0 0.0
    %98 = vmatpush1.msra.mxu0 %v49
    %99 = vmatprep.subr.mxu0 0.0
    %100 = vmatpush2.msra.mxu0 0.0
    %101 = vmatprep.subr.mxu0 0.0
    %102 = vmatpush2.msra.mxu0 0.0
    %103 = vmatprep.subr.mxu0 0.0
    %104 = vmatpush2.msra.mxu0 0.0
    %105 = vmatprep.subr.mxu0 0.0
    %106 = vmatpush2.msra.mxu0 0.0
    %107 = vmatprep.subr.mxu0 0.0
    %108 = vmatpush2.msra.mxu0 0.0
    %109 = vmatprep.subr.mxu0 0.0
    %110 = vmatpush2.msra.mxu0 0.0
    %111 = vmatprep.subr.mxu0 0.0
    %112 = vmatpush2.msra.mxu0 0.0
    %113 = vmatprep.subr.mxu0 0.0
    %114 = vmatpush2.msra.mxu0 0.0
    %115 = vmatprep.subr.mxu0 0.0
    %116 = vmatpush2.msra.mxu0 0.0
    %117 = vmatprep.subr.mxu0 0.0
    %118 = vmatpush2.msra.mxu0 0.0
    %119 = vmatprep.subr.mxu0 0.0
    %120 = vmatpush2.msra.mxu0 0.0
    %121 = vmatprep.subr.mxu0 0.0
    %122 = vmatpush2.msra.mxu0 0.0
    %123 = vmatprep.subr.mxu0 0.0
    %124 = vmatpush2.msra.mxu0 0.0
    %125 = vmatprep.subr.mxu0 0.0
    %126 = vmatpush2.msra.mxu0 0.0
    %127 = vmatprep.subr.mxu0 0.0
    %128 = vmatpush2.msra.mxu0 0.0
    %129 = vmatprep.subr.mxu0 0.0
    %130 = vmatpush2.msra.mxu0 0.0
    %131 = vmatprep.mubr.f32.mxu0 0.0
    %132 = vmatmul.mubr.f32.gmra.mxu0 %v62
    %v133 = vpop.f32.mrf.mxu0
    %v134 = vadd.f32 %v58, %v133
    %v135 = vpop.f32.mrf.mxu0
    %136 = vmatprep.mubr.f32.mxu0 0.0
    %137 = vmatmul.mubr.f32.gmra.mxu0 %v65
    %v138 = vpop.f32.mrf.mxu0
    %v139 = vadd.f32 %v58, %v138
    %v140 = vpop.f32.mrf.mxu0
    %141 = vdwg.mxu0
    %v142 = vmax.f32 %v134, 0.0
    %v143 = vmax.f32 %v139, 0.0
    %v144 = vld [vmem:[%s3] sm:$0xff]
    %v145 = vld [vmem:[%s3 + $0x8] sm:$0xff]
    %v146 = vld [vmem:[%s3 + $0x10] sm:$0xff]
    %v147 = vld [vmem:[%s3 + $0x18] sm:$0xff]
    %v148 = vld [vmem:[%s3 + $0x20] sm:$0xff]
    %v149 = vld [vmem:[%s3 + $0x28] sm:$0xff]
    %v150 = vld [vmem:[%s3 + $0x30] sm:$0xff]
    %v151 = vld [vmem:[%s3 + $0x38] sm:$0xff]
    %v152 = vld [vmem:[%s3 + $0x40] sm:$0xff]
    %v153 = vld [vmem:[%s3 + $0x48] sm:$0xff]
    %v154 = vld [vmem:[%s3 + $0x50] sm:$0xff]
    %v155 = vld [vmem:[%s3 + $0x58] sm:$0xff]
    %v156 = vld [vmem:[%s3 + $0x60] sm:$0xff]
    %v157 = vld [vmem:[%s3 + $0x68] sm:$0xff]
    %v158 = vld [vmem:[%s3 + $0x70] sm:$0xff]
    %v159 = vld [vmem:[%s3 + $0x78] sm:$0xff]
    %v160 = vld [vmem:[%s4] sm:$0x1]
    %v162 = vlaneseq
    %v163 = vshrl.u32 %v162, 7
    %v164 = vsub.s32 0, %v163
    %v165 = vrot.slane %v160, %v164
    %167 = vmatprep.subr.mxu0 0.0
    %168 = vmatpush1.msra.mxu0 %v159
    %169 = vmatprep.subr.mxu0 0.0
    %170 = vmatpush1.msra.mxu0 %v158
    %171 = vmatprep.subr.mxu0 0.0
    %172 = vmatpush1.msra.mxu0 %v157
    %173 = vmatprep.subr.mxu0 0.0
    %174 = vmatpush1.msra.mxu0 %v156
    %175 = vmatprep.subr.mxu0 0.0
    %176 = vmatpush1.msra.mxu0 %v155
    %177 = vmatprep.subr.mxu0 0.0
    %178 = vmatpush1.msra.mxu0 %v154
    %179 = vmatprep.subr.mxu0 0.0
    %180 = vmatpush1.msra.mxu0 %v153
    %181 = vmatprep.subr.mxu0 0.0
    %182 = vmatpush1.msra.mxu0 %v152
    %183 = vmatprep.subr.mxu0 0.0
    %184 = vmatpush1.msra.mxu0 %v151
    %185 = vmatprep.subr.mxu0 0.0
    %186 = vmatpush1.msra.mxu0 %v150
    %187 = vmatprep.subr.mxu0 0.0
    %188 = vmatpush1.msra.mxu0 %v149
    %189 = vmatprep.subr.mxu0 0.0
    %190 = vmatpush1.msra.mxu0 %v148
    %191 = vmatprep.subr.mxu0 0.0
    %192 = vmatpush1.msra.mxu0 %v147
    %193 = vmatprep.subr.mxu0 0.0
    %194 = vmatpush1.msra.mxu0 %v146
    %195 = vmatprep.subr.mxu0 0.0
    %196 = vmatpush1.msra.mxu0 %v145
    %197 = vmatprep.subr.mxu0 0.0
    %198 = vmatpush1.msra.mxu0 %v144
    %199 = vmatprep.subr.mxu0 0.0
    %200 = vmatpush2.msra.mxu0 0.0
    %201 = vmatprep.subr.mxu0 0.0
    %202 = vmatpush2.msra.mxu0 0.0
    %203 = vmatprep.subr.mxu0 0.0
    %204 = vmatpush2.msra.mxu0 0.0
    %205 = vmatprep.subr.mxu0 0.0
    %206 = vmatpush2.msra.mxu0 0.0
    %207 = vmatprep.subr.mxu0 0.0
    %208 = vmatpush2.msra.mxu0 0.0
    %209 = vmatprep.subr.mxu0 0.0
    %210 = vmatpush2.msra.mxu0 0.0
    %211 = vmatprep.subr.mxu0 0.0
    %212 = vmatpush2.msra.mxu0 0.0
    %213 = vmatprep.subr.mxu0 0.0
    %214 = vmatpush2.msra.mxu0 0.0
    %215 = vmatprep.subr.mxu0 0.0
    %216 = vmatpush2.msra.mxu0 0.0
    %217 = vmatprep.subr.mxu0 0.0
    %218 = vmatpush2.msra.mxu0 0.0
    %219 = vmatprep.subr.mxu0 0.0
    %220 = vmatpush2.msra.mxu0 0.0
    %221 = vmatprep.subr.mxu0 0.0
    %222 = vmatpush2.msra.mxu0 0.0
    %223 = vmatprep.subr.mxu0 0.0
    %224 = vmatpush2.msra.mxu0 0.0
    %225 = vmatprep.subr.mxu0 0.0
    %226 = vmatpush2.msra.mxu0 0.0
    %227 = vmatprep.subr.mxu0 0.0
    %228 = vmatpush2.msra.mxu0 0.0
    %229 = vmatprep.subr.mxu0 0.0
    %230 = vmatpush2.msra.mxu0 0.0
    %231 = vmatprep.mubr.f32.mxu0 0.0
    %232 = vmatmul.mubr.f32.gmra.mxu0 %v142
    %v233 = vpop.f32.mrf.mxu0
    %v234 = vadd.f32 %v165, %v233
    %v235 = vpop.f32.mrf.mxu0
    %236 = vmatprep.mubr.f32.mxu0 0.0
    %237 = vmatmul.mubr.f32.gmra.mxu0 %v143
    %v238 = vpop.f32.mrf.mxu0
    %v239 = vadd.f32 %v165, %v238
    %v240 = vpop.f32.mrf.mxu0
    %241 = vdwg.mxu0
    %242 = vst [vmem:[%s13] sm:$0xff] %v234
    %243 = vst [vmem:[%s13 + $0x8] sm:$0xff] %v239
    %v244 = vld [vmem:[%s5] sm:$0x1]
    %v245 = vld [vmem:[%s6] sm:$0x1]
    %v246 = vld [vmem:[%s7] sm:$0xff]
    %v247 = vld [vmem:[%s7 + $0x8] sm:$0xff]
    %v248 = vld [vmem:[%s7 + $0x10] sm:$0xff]
    %v249 = vld [vmem:[%s7 + $0x18] sm:$0xff]
    %v250 = vld [vmem:[%s7 + $0x20] sm:$0xff]
    %v251 = vld [vmem:[%s7 + $0x28] sm:$0xff]
    %v252 = vld [vmem:[%s7 + $0x30] sm:$0xff]
    %v253 = vld [vmem:[%s7 + $0x38] sm:$0xff]
    %v254 = vld [vmem:[%s7 + $0x40] sm:$0xff]
    %v255 = vld [vmem:[%s7 + $0x48] sm:$0xff]
    %v256 = vld [vmem:[%s7 + $0x50] sm:$0xff]
    %v257 = vld [vmem:[%s7 + $0x58] sm:$0xff]
    %v258 = vld [vmem:[%s7 + $0x60] sm:$0xff]
    %v259 = vld [vmem:[%s7 + $0x68] sm:$0xff]
    %v260 = vld [vmem:[%s7 + $0x70] sm:$0xff]
    %v261 = vld [vmem:[%s7 + $0x78] sm:$0xff]
    %v262 = vlaneseq
    %v263 = vand.u32 %v262, 127
    %v264 = vld [vmem:[%s8] sm:$0xff]
    %v265 = vld [vmem:[%s8 + $0x8] sm:$0xff]
    %266 = vset.pattern.permute.xlu0 0
    %267 = vperm.xlu0 %266, %v264
    %v268 = vpop.permute.xlu0 %267
    %269 = vset.pattern.permute.xlu0 0
    %270 = vperm.xlu0 %269, %v265
    %v271 = vpop.permute.xlu0 %270
    %vm272 = vcmp.eq.s32.totalorder %v263, %v268
    %vm273 = vcmp.eq.s32.totalorder %v263, %v271
    %v274 = vsel %vm272, 1, 0
    %v275 = vsel %vm273, 1, 0
    %v276 = vcvt.s32.f32 %v274
    %v277 = vcvt.s32.f32 %v275
    %v278 = vld [vmem:[%s9] sm:$0xff]
    %v279 = vld [vmem:[%s9 + $0x8] sm:$0xff]
    %280 = vset.pattern.permute.xlu0 0
    %281 = vperm.xlu0 %280, %v278
    %v282 = vpop.permute.xlu0 %281
    %283 = vset.pattern.permute.xlu0 0
    %284 = vperm.xlu0 %283, %v279
    %v285 = vpop.permute.xlu0 %284
    %vm286 = vcmp.eq.s32.totalorder %v263, %v282
    %vm287 = vcmp.eq.s32.totalorder %v263, %v285
    %v288 = vsel %vm286, 1, 0
    %v289 = vsel %vm287, 1, 0
    %v290 = vcvt.s32.f32 %v288
    %v291 = vcvt.s32.f32 %v289
    %292 = vmatprep.subr.mxu0 0.0
    %293 = vmatpush1.msra.mxu0 %v261
    %294 = vmatprep.subr.mxu0 0.0
    %295 = vmatpush1.msra.mxu0 %v260
    %296 = vmatprep.subr.mxu0 0.0
    %297 = vmatpush1.msra.mxu0 %v259
    %298 = vmatprep.subr.mxu0 0.0
    %299 = vmatpush1.msra.mxu0 %v258
    %300 = vmatprep.subr.mxu0 0.0
    %301 = vmatpush1.msra.mxu0 %v257
    %302 = vmatprep.subr.mxu0 0.0
    %303 = vmatpush1.msra.mxu0 %v256
    %304 = vmatprep.subr.mxu0 0.0
    %305 = vmatpush1.msra.mxu0 %v255
    %306 = vmatprep.subr.mxu0 0.0
    %307 = vmatpush1.msra.mxu0 %v254
    %308 = vmatprep.subr.mxu0 0.0
    %309 = vmatpush1.msra.mxu0 %v253
    %310 = vmatprep.subr.mxu0 0.0
    %311 = vmatpush1.msra.mxu0 %v252
    %312 = vmatprep.subr.mxu0 0.0
    %313 = vmatpush1.msra.mxu0 %v251
    %314 = vmatprep.subr.mxu0 0.0
    %315 = vmatpush1.msra.mxu0 %v250
    %316 = vmatprep.subr.mxu0 0.0
    %317 = vmatpush1.msra.mxu0 %v249
    %318 = vmatprep.subr.mxu0 0.0
    %319 = vmatpush1.msra.mxu0 %v248
    %320 = vmatprep.subr.mxu0 0.0
    %321 = vmatpush1.msra.mxu0 %v247
    %322 = vmatprep.subr.mxu0 0.0
    %323 = vmatpush1.msra.mxu0 %v246
    %324 = vmatprep.subr.mxu0 0.0
    %325 = vmatpush2.msra.mxu0 0.0
    %326 = vmatprep.subr.mxu0 0.0
    %327 = vmatpush2.msra.mxu0 0.0
    %328 = vmatprep.subr.mxu0 0.0
    %329 = vmatpush2.msra.mxu0 0.0
    %330 = vmatprep.subr.mxu0 0.0
    %331 = vmatpush2.msra.mxu0 0.0
    %332 = vmatprep.subr.mxu0 0.0
    %333 = vmatpush2.msra.mxu0 0.0
    %334 = vmatprep.subr.mxu0 0.0
    %335 = vmatpush2.msra.mxu0 0.0
    %336 = vmatprep.subr.mxu0 0.0
    %337 = vmatpush2.msra.mxu0 0.0
    %338 = vmatprep.subr.mxu0 0.0
    %339 = vmatpush2.msra.mxu0 0.0
    %340 = vmatprep.subr.mxu0 0.0
    %341 = vmatpush2.msra.mxu0 0.0
    %342 = vmatprep.subr.mxu0 0.0
    %343 = vmatpush2.msra.mxu0 0.0
    %344 = vmatprep.subr.mxu0 0.0
    %345 = vmatpush2.msra.mxu0 0.0
    %346 = vmatprep.subr.mxu0 0.0
    %347 = vmatpush2.msra.mxu0 0.0
    %348 = vmatprep.subr.mxu0 0.0
    %349 = vmatpush2.msra.mxu0 0.0
    %350 = vmatprep.subr.mxu0 0.0
    %351 = vmatpush2.msra.mxu0 0.0
    %352 = vmatprep.subr.mxu0 0.0
    %353 = vmatpush2.msra.mxu0 0.0
    %354 = vmatprep.subr.mxu0 0.0
    %355 = vmatpush2.msra.mxu0 0.0
    %356 = vmatprep.mubr.f32.mxu0 0.0
    %357 = vmatmul.mubr.f32.gmra.mxu0 %v290
    %v358 = vpop.f32.mrf.mxu0
    %v359 = vadd.f32 %v234, %v358
    %v360 = vpop.f32.mrf.mxu0
    %361 = vmatprep.mubr.f32.mxu0 0.0
    %362 = vmatmul.mubr.f32.gmra.mxu0 %v291
    %v363 = vpop.f32.mrf.mxu0
    %v364 = vadd.f32 %v239, %v363
    %v365 = vpop.f32.mrf.mxu0
    %366 = vdwg.mxu0
    %v367 = vmul.f32 %v359, %v276
    %v368 = vmul.f32 %v364, %v277
    %369 = vadd.xlane.f32.xlu0 %v367
    %v370 = vpop.xlane.xlu0 %369
    %371 = vadd.xlane.f32.xlu0 %v368
    %v372 = vpop.xlane.xlu0 %371
    %v374 = vlaneseq
    %v375 = vshrl.u32 %v374, 7
    %v376 = vsub.s32 0, %v375
    %v377 = vrot.slane %v244, %v376
    %v379 = vadd.f32 %v377, %v234
    %v380 = vmul.f32 %v379, %v276
    %vm381 = vcmask 1041408
    %v382 = vsel %vm381, %v380, 0.0
    %383 = vadd.xlane.f32.xlu0 %v382
    %v384 = vpop.xlane.xlu0 %383
    %v385 = vrot.slane %v384, 4
    %v386 = vadd.f32 %v384, %v385
    %v387 = vrot.slane %v386, 2
    %v388 = vadd.f32 %v386, %v387
    %v389 = vrot.slane %v388, 1
    %v390 = vadd.f32 %v388, %v389
    %s391 = vtos %v390
    %v392 = vld [vmem:[%s11] sm:$0x3]
    %393 = vset.pattern.permute.xlu0 0
    %394 = vperm.xlu0 %393, %v392
    %v395 = vpop.permute.xlu0 %394
    %vm396 = vcmp.eq.s32.totalorder %v263, %v395
    %v397 = vsel %vm396, 1, 0
    %v398 = vcvt.s32.f32 %v397
    %v399 = vld [vmem:[%s10] sm:$0xff]
    %v400 = vld [vmem:[%s10 + $0x8] sm:$0xff]
    %v401 = vmul.f32 %v399, %v370
    %v402 = vmul.f32 %v400, %v372
    %vm403 = vcmask 7168
    %v404 = vsel %vm403, %v401, 0.0
    %v405 = vsel %vm403, %v402, 0.0
    %v406 = vadd.f32 %v404, %v405
    %407 = vadd.xlane.f32.xlu0 %v406
    %v408 = vpop.xlane.xlu0 %407
    %v409 = vrot.slane %v408, 4
    %v410 = vadd.f32 %v408, %v409
    %v411 = vrot.slane %v410, 2
    %v412 = vadd.f32 %v410, %v411
    %v413 = vrot.slane %v412, 1
    %v414 = vadd.f32 %v412, %v413
    %s415 = vtos %v414
    %s416 = sadd.f32 %s391, %s415
    %v418 = vlaneseq
    %v419 = vshrl.u32 %v418, 7
    %v420 = vsub.s32 0, %v419
    %v421 = vrot.slane %v245, %v420
    %v423 = vmul.f32 %v421, %v398
    %v424 = vsel %vm381, %v423, 0.0
    %425 = vadd.xlane.f32.xlu0 %v424
    %v426 = vpop.xlane.xlu0 %425
    %v427 = vrot.slane %v426, 4
    %v428 = vadd.f32 %v426, %v427
    %v429 = vrot.slane %v428, 2
    %v430 = vadd.f32 %v428, %v429
    %v431 = vrot.slane %v430, 1
    %v432 = vadd.f32 %v430, %v431
    %s433 = vtos %v432
    %s434 = sadd.f32 %s416, %s433
    %v435 = vmul.f32 %v246, 1.442695
    %v436 = vpow.pop %v435
    %v437 = vmul.f32 %v247, 1.442695
    %v438 = vpow.pop %v437
    %v439 = vmul.f32 %v248, 1.442695
    %v440 = vpow.pop %v439
    %v441 = vmul.f32 %v249, 1.442695
    %v442 = vpow.pop %v441
    %v443 = vmul.f32 %v250, 1.442695
    %v444 = vpow.pop %v443
    %v445 = vmul.f32 %v251, 1.442695
    %v446 = vpow.pop %v445
    %v447 = vmul.f32 %v252, 1.442695
    %v448 = vpow.pop %v447
    %v449 = vmul.f32 %v253, 1.442695
    %v450 = vpow.pop %v449
    %v451 = vmul.f32 %v254, 1.442695
    %v452 = vpow.pop %v451
    %v453 = vmul.f32 %v255, 1.442695
    %v454 = vpow.pop %v453
    %v455 = vmul.f32 %v256, 1.442695
    %v456 = vpow.pop %v455
    %v457 = vmul.f32 %v257, 1.442695
    %v458 = vpow.pop %v457
    %v459 = vmul.f32 %v258, 1.442695
    %v460 = vpow.pop %v459
    %v461 = vmul.f32 %v259, 1.442695
    %v462 = vpow.pop %v461
    %v463 = vmul.f32 %v260, 1.442695
    %v464 = vpow.pop %v463
    %v465 = vmul.f32 %v261, 1.442695
    %v466 = vpow.pop %v465
    %v467 = vld [vmem:[%s12] sm:$0x3]
    %v468 = vsel %vm381, %v379, -inf
    %469 = vmax.xlane.f32.xlu0 %v468
    %v470 = vpop.xlane.xlu0 %469
    %v471 = vsub.f32 %v379, %v470
    %v472 = vmul.f32 %v471, 1.442695
    %v473 = vpow.pop %v472
    %474 = vmatprep.subr.mxu0 0.0
    %475 = vmatpush1.msra.mxu0 %v466
    %476 = vmatprep.subr.mxu0 0.0
    %477 = vmatpush1.msra.mxu0 %v464
    %478 = vmatprep.subr.mxu0 0.0
    %479 = vmatpush1.msra.mxu0 %v462
    %480 = vmatprep.subr.mxu0 0.0
    %481 = vmatpush1.msra.mxu0 %v460
    %482 = vmatprep.subr.mxu0 0.0
    %483 = vmatpush1.msra.mxu0 %v458
    %484 = vmatprep.subr.mxu0 0.0
    %485 = vmatpush1.msra.mxu0 %v456
    %486 = vmatprep.subr.mxu0 0.0
    %487 = vmatpush1.msra.mxu0 %v454
    %488 = vmatprep.subr.mxu0 0.0
    %489 = vmatpush1.msra.mxu0 %v452
    %490 = vmatprep.subr.mxu0 0.0
    %491 = vmatpush1.msra.mxu0 %v450
    %492 = vmatprep.subr.mxu0 0.0
    %493 = vmatpush1.msra.mxu0 %v448
    %494 = vmatprep.subr.mxu0 0.0
    %495 = vmatpush1.msra.mxu0 %v446
    %496 = vmatprep.subr.mxu0 0.0
    %497 = vmatpush1.msra.mxu0 %v444
    %498 = vmatprep.subr.mxu0 0.0
    %499 = vmatpush1.msra.mxu0 %v442
    %500 = vmatprep.subr.mxu0 0.0
    %501 = vmatpush1.msra.mxu0 %v440
    %502 = vmatprep.subr.mxu0 0.0
    %503 = vmatpush1.msra.mxu0 %v438
    %504 = vmatprep.subr.mxu0 0.0
    %505 = vmatpush1.msra.mxu0 %v436
    %506 = vmatprep.subr.mxu0 0.0
    %507 = vmatpush2.msra.mxu0 0.0
    %508 = vmatprep.subr.mxu0 0.0
    %509 = vmatpush2.msra.mxu0 0.0
    %510 = vmatprep.subr.mxu0 0.0
    %511 = vmatpush2.msra.mxu0 0.0
    %512 = vmatprep.subr.mxu0 0.0
    %513 = vmatpush2.msra.mxu0 0.0
    %514 = vmatprep.subr.mxu0 0.0
    %515 = vmatpush2.msra.mxu0 0.0
    %516 = vmatprep.subr.mxu0 0.0
    %517 = vmatpush2.msra.mxu0 0.0
    %518 = vmatprep.subr.mxu0 0.0
    %519 = vmatpush2.msra.mxu0 0.0
    %520 = vmatprep.subr.mxu0 0.0
    %521 = vmatpush2.msra.mxu0 0.0
    %522 = vmatprep.subr.mxu0 0.0
    %523 = vmatpush2.msra.mxu0 0.0
    %524 = vmatprep.subr.mxu0 0.0
    %525 = vmatpush2.msra.mxu0 0.0
    %526 = vmatprep.subr.mxu0 0.0
    %527 = vmatpush2.msra.mxu0 0.0
    %528 = vmatprep.subr.mxu0 0.0
    %529 = vmatpush2.msra.mxu0 0.0
    %530 = vmatprep.subr.mxu0 0.0
    %531 = vmatpush2.msra.mxu0 0.0
    %532 = vmatprep.subr.mxu0 0.0
    %533 = vmatpush2.msra.mxu0 0.0
    %534 = vmatprep.subr.mxu0 0.0
    %535 = vmatpush2.msra.mxu0 0.0
    %536 = vmatprep.subr.mxu0 0.0
    %537 = vmatpush2.msra.mxu0 0.0
    %538 = vmatprep.mubr.f32.mxu0 0.0
    %539 = vmatmul.mubr.f32.gmra.mxu0 %v473
    %v540 = vpop.f32.mrf.mxu0
    %v541 = vadd.f32 0.0, %v540
    %v542 = vpop.f32.mrf.mxu0
    %543 = vdwg.mxu0
    %v545 = vrot.slane %v470, 6
    %v547 = vadd.f32 %v234, %v545
    %v548 = vmax.f32 %v541, 1e-30
    %v549 = vlog2.pop %v548
    %v550 = vmul.f32 %v549, 0.6931472
    %v552 = vrot.slane %v550, 6
    %v554 = vadd.f32 %v547, %v552
    %vm555 = vcmp.gt.s32.totalorder %v467, 1
    %v556 = vsel %vm555, 1, 0
    %557 = vset.pattern.permute.xlu0 0
    %558 = vperm.xlu0 %557, %v556
    %v559 = vpop.permute.xlu0 %558
    %vm560 = vcmp.eq.s32.totalorder %v559, 1
    %v562 = vrot.slane %v554, 2
    %v564 = vsel %vm560, %v562, %v379
    %v565 = vsel %vm381, %v564, -inf
    %566 = vmax.xlane.f32.xlu0 %v565
    %v567 = vpop.xlane.xlu0 %566
    %v568 = vsub.f32 %v564, %v567
    %v569 = vmul.f32 %v568, 1.442695
    %v570 = vpow.pop %v569
    %571 = vmatprep.subr.mxu0 0.0
    %572 = vmatpush1.msra.mxu0 %v466
    %573 = vmatprep.subr.mxu0 0.0
    %574 = vmatpush1.msra.mxu0 %v464
    %575 = vmatprep.subr.mxu0 0.0
    %576 = vmatpush1.msra.mxu0 %v462
    %577 = vmatprep.subr.mxu0 0.0
    %578 = vmatpush1.msra.mxu0 %v460
    %579 = vmatprep.subr.mxu0 0.0
    %580 = vmatpush1.msra.mxu0 %v458
    %581 = vmatprep.subr.mxu0 0.0
    %582 = vmatpush1.msra.mxu0 %v456
    %583 = vmatprep.subr.mxu0 0.0
    %584 = vmatpush1.msra.mxu0 %v454
    %585 = vmatprep.subr.mxu0 0.0
    %586 = vmatpush1.msra.mxu0 %v452
    %587 = vmatprep.subr.mxu0 0.0
    %588 = vmatpush1.msra.mxu0 %v450
    %589 = vmatprep.subr.mxu0 0.0
    %590 = vmatpush1.msra.mxu0 %v448
    %591 = vmatprep.subr.mxu0 0.0
    %592 = vmatpush1.msra.mxu0 %v446
    %593 = vmatprep.subr.mxu0 0.0
    %594 = vmatpush1.msra.mxu0 %v444
    %595 = vmatprep.subr.mxu0 0.0
    %596 = vmatpush1.msra.mxu0 %v442
    %597 = vmatprep.subr.mxu0 0.0
    %598 = vmatpush1.msra.mxu0 %v440
    %599 = vmatprep.subr.mxu0 0.0
    %600 = vmatpush1.msra.mxu0 %v438
    %601 = vmatprep.subr.mxu0 0.0
    %602 = vmatpush1.msra.mxu0 %v436
    %603 = vmatprep.subr.mxu0 0.0
    %604 = vmatpush2.msra.mxu0 0.0
    %605 = vmatprep.subr.mxu0 0.0
    %606 = vmatpush2.msra.mxu0 0.0
    %607 = vmatprep.subr.mxu0 0.0
    %608 = vmatpush2.msra.mxu0 0.0
    %609 = vmatprep.subr.mxu0 0.0
    %610 = vmatpush2.msra.mxu0 0.0
    %611 = vmatprep.subr.mxu0 0.0
    %612 = vmatpush2.msra.mxu0 0.0
    %613 = vmatprep.subr.mxu0 0.0
    %614 = vmatpush2.msra.mxu0 0.0
    %615 = vmatprep.subr.mxu0 0.0
    %616 = vmatpush2.msra.mxu0 0.0
    %617 = vmatprep.subr.mxu0 0.0
    %618 = vmatpush2.msra.mxu0 0.0
    %619 = vmatprep.subr.mxu0 0.0
    %620 = vmatpush2.msra.mxu0 0.0
    %621 = vmatprep.subr.mxu0 0.0
    %622 = vmatpush2.msra.mxu0 0.0
    %623 = vmatprep.subr.mxu0 0.0
    %624 = vmatpush2.msra.mxu0 0.0
    %625 = vmatprep.subr.mxu0 0.0
    %626 = vmatpush2.msra.mxu0 0.0
    %627 = vmatprep.subr.mxu0 0.0
    %628 = vmatpush2.msra.mxu0 0.0
    %629 = vmatprep.subr.mxu0 0.0
    %630 = vmatpush2.msra.mxu0 0.0
    %631 = vmatprep.subr.mxu0 0.0
    %632 = vmatpush2.msra.mxu0 0.0
    %633 = vmatprep.subr.mxu0 0.0
    %634 = vmatpush2.msra.mxu0 0.0
    %635 = vmatprep.mubr.f32.mxu0 0.0
    %636 = vmatmul.mubr.f32.gmra.mxu0 %v570
    %v637 = vpop.f32.mrf.mxu0
    %v638 = vadd.f32 0.0, %v637
    %v639 = vpop.f32.mrf.mxu0
    %640 = vdwg.mxu0
    %v642 = vrot.slane %v567, 4
    %v644 = vadd.f32 %v234, %v642
    %v645 = vmax.f32 %v638, 1e-30
    %v646 = vlog2.pop %v645
    %v647 = vmul.f32 %v646, 0.6931472
    %v649 = vrot.slane %v647, 4
    %v651 = vadd.f32 %v644, %v649
    %vm652 = vcmp.gt.s32.totalorder %v467, 2
    %v653 = vsel %vm652, 1, 0
    %654 = vset.pattern.permute.xlu0 0
    %655 = vperm.xlu0 %654, %v653
    %v656 = vpop.permute.xlu0 %655
    %vm657 = vcmp.eq.s32.totalorder %v656, 1
    %v659 = vrot.slane %v651, 4
    %v661 = vsel %vm657, %v659, %v564
    %v662 = vsel %vm381, %v661, -inf
    %663 = vmax.xlane.f32.xlu0 %v662
    %v664 = vpop.xlane.xlu0 %663
    %v665 = vsub.f32 %v661, %v664
    %v666 = vmul.f32 %v665, 1.442695
    %v667 = vpow.pop %v666
    %668 = vmatprep.subr.mxu0 0.0
    %669 = vmatpush1.msra.mxu0 %v466
    %670 = vmatprep.subr.mxu0 0.0
    %671 = vmatpush1.msra.mxu0 %v464
    %672 = vmatprep.subr.mxu0 0.0
    %673 = vmatpush1.msra.mxu0 %v462
    %674 = vmatprep.subr.mxu0 0.0
    %675 = vmatpush1.msra.mxu0 %v460
    %676 = vmatprep.subr.mxu0 0.0
    %677 = vmatpush1.msra.mxu0 %v458
    %678 = vmatprep.subr.mxu0 0.0
    %679 = vmatpush1.msra.mxu0 %v456
    %680 = vmatprep.subr.mxu0 0.0
    %681 = vmatpush1.msra.mxu0 %v454
    %682 = vmatprep.subr.mxu0 0.0
    %683 = vmatpush1.msra.mxu0 %v452
    %684 = vmatprep.subr.mxu0 0.0
    %685 = vmatpush1.msra.mxu0 %v450
    %686 = vmatprep.subr.mxu0 0.0
    %687 = vmatpush1.msra.mxu0 %v448
    %688 = vmatprep.subr.mxu0 0.0
    %689 = vmatpush1.msra.mxu0 %v446
    %690 = vmatprep.subr.mxu0 0.0
    %691 = vmatpush1.msra.mxu0 %v444
    %692 = vmatprep.subr.mxu0 0.0
    %693 = vmatpush1.msra.mxu0 %v442
    %694 = vmatprep.subr.mxu0 0.0
    %695 = vmatpush1.msra.mxu0 %v440
    %696 = vmatprep.subr.mxu0 0.0
    %697 = vmatpush1.msra.mxu0 %v438
    %698 = vmatprep.subr.mxu0 0.0
    %699 = vmatpush1.msra.mxu0 %v436
    %700 = vmatprep.subr.mxu0 0.0
    %701 = vmatpush2.msra.mxu0 0.0
    %702 = vmatprep.subr.mxu0 0.0
    %703 = vmatpush2.msra.mxu0 0.0
    %704 = vmatprep.subr.mxu0 0.0
    %705 = vmatpush2.msra.mxu0 0.0
    %706 = vmatprep.subr.mxu0 0.0
    %707 = vmatpush2.msra.mxu0 0.0
    %708 = vmatprep.subr.mxu0 0.0
    %709 = vmatpush2.msra.mxu0 0.0
    %710 = vmatprep.subr.mxu0 0.0
    %711 = vmatpush2.msra.mxu0 0.0
    %712 = vmatprep.subr.mxu0 0.0
    %713 = vmatpush2.msra.mxu0 0.0
    %714 = vmatprep.subr.mxu0 0.0
    %715 = vmatpush2.msra.mxu0 0.0
    %716 = vmatprep.subr.mxu0 0.0
    %717 = vmatpush2.msra.mxu0 0.0
    %718 = vmatprep.subr.mxu0 0.0
    %719 = vmatpush2.msra.mxu0 0.0
    %720 = vmatprep.subr.mxu0 0.0
    %721 = vmatpush2.msra.mxu0 0.0
    %722 = vmatprep.subr.mxu0 0.0
    %723 = vmatpush2.msra.mxu0 0.0
    %724 = vmatprep.subr.mxu0 0.0
    %725 = vmatpush2.msra.mxu0 0.0
    %726 = vmatprep.subr.mxu0 0.0
    %727 = vmatpush2.msra.mxu0 0.0
    %728 = vmatprep.subr.mxu0 0.0
    %729 = vmatpush2.msra.mxu0 0.0
    %730 = vmatprep.subr.mxu0 0.0
    %731 = vmatpush2.msra.mxu0 0.0
    %732 = vmatprep.mubr.f32.mxu0 0.0
    %733 = vmatmul.mubr.f32.gmra.mxu0 %v667
    %v734 = vpop.f32.mrf.mxu0
    %v735 = vadd.f32 0.0, %v734
    %v736 = vpop.f32.mrf.mxu0
    %737 = vdwg.mxu0
    %v739 = vrot.slane %v664, 2
    %v741 = vadd.f32 %v234, %v739
    %v742 = vmax.f32 %v735, 1e-30
    %v743 = vlog2.pop %v742
    %v744 = vmul.f32 %v743, 0.6931472
    %v746 = vrot.slane %v744, 2
    %v748 = vadd.f32 %v741, %v746
    %vm749 = vcmp.gt.s32.totalorder %v467, 3
    %v750 = vsel %vm749, 1, 0
    %751 = vset.pattern.permute.xlu0 0
    %752 = vperm.xlu0 %751, %v750
    %v753 = vpop.permute.xlu0 %752
    %vm754 = vcmp.eq.s32.totalorder %v753, 1
    %v756 = vrot.slane %v748, 6
    %v758 = vsel %vm754, %v756, %v661
    %v759 = vsel %vm381, %v758, -inf
    %760 = vmax.xlane.f32.xlu0 %v759
    %v761 = vpop.xlane.xlu0 %760
    %v762 = vsub.f32 %v758, %v761
    %v763 = vmul.f32 %v762, 1.442695
    %v764 = vpow.pop %v763
    %765 = vmatprep.subr.mxu0 0.0
    %766 = vmatpush1.msra.mxu0 %v466
    %767 = vmatprep.subr.mxu0 0.0
    %768 = vmatpush1.msra.mxu0 %v464
    %769 = vmatprep.subr.mxu0 0.0
    %770 = vmatpush1.msra.mxu0 %v462
    %771 = vmatprep.subr.mxu0 0.0
    %772 = vmatpush1.msra.mxu0 %v460
    %773 = vmatprep.subr.mxu0 0.0
    %774 = vmatpush1.msra.mxu0 %v458
    %775 = vmatprep.subr.mxu0 0.0
    %776 = vmatpush1.msra.mxu0 %v456
    %777 = vmatprep.subr.mxu0 0.0
    %778 = vmatpush1.msra.mxu0 %v454
    %779 = vmatprep.subr.mxu0 0.0
    %780 = vmatpush1.msra.mxu0 %v452
    %781 = vmatprep.subr.mxu0 0.0
    %782 = vmatpush1.msra.mxu0 %v450
    %783 = vmatprep.subr.mxu0 0.0
    %784 = vmatpush1.msra.mxu0 %v448
    %785 = vmatprep.subr.mxu0 0.0
    %786 = vmatpush1.msra.mxu0 %v446
    %787 = vmatprep.subr.mxu0 0.0
    %788 = vmatpush1.msra.mxu0 %v444
    %789 = vmatprep.subr.mxu0 0.0
    %790 = vmatpush1.msra.mxu0 %v442
    %791 = vmatprep.subr.mxu0 0.0
    %792 = vmatpush1.msra.mxu0 %v440
    %793 = vmatprep.subr.mxu0 0.0
    %794 = vmatpush1.msra.mxu0 %v438
    %795 = vmatprep.subr.mxu0 0.0
    %796 = vmatpush1.msra.mxu0 %v436
    %797 = vmatprep.subr.mxu0 0.0
    %798 = vmatpush2.msra.mxu0 0.0
    %799 = vmatprep.subr.mxu0 0.0
    %800 = vmatpush2.msra.mxu0 0.0
    %801 = vmatprep.subr.mxu0 0.0
    %802 = vmatpush2.msra.mxu0 0.0
    %803 = vmatprep.subr.mxu0 0.0
    %804 = vmatpush2.msra.mxu0 0.0
    %805 = vmatprep.subr.mxu0 0.0
    %806 = vmatpush2.msra.mxu0 0.0
    %807 = vmatprep.subr.mxu0 0.0
    %808 = vmatpush2.msra.mxu0 0.0
    %809 = vmatprep.subr.mxu0 0.0
    %810 = vmatpush2.msra.mxu0 0.0
    %811 = vmatprep.subr.mxu0 0.0
    %812 = vmatpush2.msra.mxu0 0.0
    %813 = vmatprep.subr.mxu0 0.0
    %814 = vmatpush2.msra.mxu0 0.0
    %815 = vmatprep.subr.mxu0 0.0
    %816 = vmatpush2.msra.mxu0 0.0
    %817 = vmatprep.subr.mxu0 0.0
    %818 = vmatpush2.msra.mxu0 0.0
    %819 = vmatprep.subr.mxu0 0.0
    %820 = vmatpush2.msra.mxu0 0.0
    %821 = vmatprep.subr.mxu0 0.0
    %822 = vmatpush2.msra.mxu0 0.0
    %823 = vmatprep.subr.mxu0 0.0
    %824 = vmatpush2.msra.mxu0 0.0
    %825 = vmatprep.subr.mxu0 0.0
    %826 = vmatpush2.msra.mxu0 0.0
    %827 = vmatprep.subr.mxu0 0.0
    %828 = vmatpush2.msra.mxu0 0.0
    %829 = vmatprep.mubr.f32.mxu0 0.0
    %830 = vmatmul.mubr.f32.gmra.mxu0 %v764
    %v831 = vpop.f32.mrf.mxu0
    %v832 = vadd.f32 0.0, %v831
    %v833 = vpop.f32.mrf.mxu0
    %834 = vdwg.mxu0
    %v835 = vadd.f32 %v239, %v761
    %v836 = vmax.f32 %v832, 1e-30
    %v837 = vlog2.pop %v836
    %v838 = vmul.f32 %v837, 0.6931472
    %v839 = vadd.f32 %v835, %v838
    %vm840 = vcmp.gt.s32.totalorder %v467, 4
    %v841 = vsel %vm840, 1, 0
    %842 = vset.pattern.permute.xlu0 0
    %843 = vperm.xlu0 %842, %v841
    %v844 = vpop.permute.xlu0 %843
    %vm845 = vcmp.eq.s32.totalorder %v844, 1
    %v846 = vsel %vm845, %v839, %v758
    %v847 = vsel %vm381, %v846, -inf
    %848 = vmax.xlane.f32.xlu0 %v847
    %v849 = vpop.xlane.xlu0 %848
    %v850 = vsub.f32 %v846, %v849
    %v851 = vmul.f32 %v850, 1.442695
    %v852 = vpow.pop %v851
    %853 = vmatprep.subr.mxu0 0.0
    %854 = vmatpush1.msra.mxu0 %v466
    %855 = vmatprep.subr.mxu0 0.0
    %856 = vmatpush1.msra.mxu0 %v464
    %857 = vmatprep.subr.mxu0 0.0
    %858 = vmatpush1.msra.mxu0 %v462
    %859 = vmatprep.subr.mxu0 0.0
    %860 = vmatpush1.msra.mxu0 %v460
    %861 = vmatprep.subr.mxu0 0.0
    %862 = vmatpush1.msra.mxu0 %v458
    %863 = vmatprep.subr.mxu0 0.0
    %864 = vmatpush1.msra.mxu0 %v456
    %865 = vmatprep.subr.mxu0 0.0
    %866 = vmatpush1.msra.mxu0 %v454
    %867 = vmatprep.subr.mxu0 0.0
    %868 = vmatpush1.msra.mxu0 %v452
    %869 = vmatprep.subr.mxu0 0.0
    %870 = vmatpush1.msra.mxu0 %v450
    %871 = vmatprep.subr.mxu0 0.0
    %872 = vmatpush1.msra.mxu0 %v448
    %873 = vmatprep.subr.mxu0 0.0
    %874 = vmatpush1.msra.mxu0 %v446
    %875 = vmatprep.subr.mxu0 0.0
    %876 = vmatpush1.msra.mxu0 %v444
    %877 = vmatprep.subr.mxu0 0.0
    %878 = vmatpush1.msra.mxu0 %v442
    %879 = vmatprep.subr.mxu0 0.0
    %880 = vmatpush1.msra.mxu0 %v440
    %881 = vmatprep.subr.mxu0 0.0
    %882 = vmatpush1.msra.mxu0 %v438
    %883 = vmatprep.subr.mxu0 0.0
    %884 = vmatpush1.msra.mxu0 %v436
    %885 = vmatprep.subr.mxu0 0.0
    %886 = vmatpush2.msra.mxu0 0.0
    %887 = vmatprep.subr.mxu0 0.0
    %888 = vmatpush2.msra.mxu0 0.0
    %889 = vmatprep.subr.mxu0 0.0
    %890 = vmatpush2.msra.mxu0 0.0
    %891 = vmatprep.subr.mxu0 0.0
    %892 = vmatpush2.msra.mxu0 0.0
    %893 = vmatprep.subr.mxu0 0.0
    %894 = vmatpush2.msra.mxu0 0.0
    %895 = vmatprep.subr.mxu0 0.0
    %896 = vmatpush2.msra.mxu0 0.0
    %897 = vmatprep.subr.mxu0 0.0
    %898 = vmatpush2.msra.mxu0 0.0
    %899 = vmatprep.subr.mxu0 0.0
    %900 = vmatpush2.msra.mxu0 0.0
    %901 = vmatprep.subr.mxu0 0.0
    %902 = vmatpush2.msra.mxu0 0.0
    %903 = vmatprep.subr.mxu0 0.0
    %904 = vmatpush2.msra.mxu0 0.0
    %905 = vmatprep.subr.mxu0 0.0
    %906 = vmatpush2.msra.mxu0 0.0
    %907 = vmatprep.subr.mxu0 0.0
    %908 = vmatpush2.msra.mxu0 0.0
    %909 = vmatprep.subr.mxu0 0.0
    %910 = vmatpush2.msra.mxu0 0.0
    %911 = vmatprep.subr.mxu0 0.0
    %912 = vmatpush2.msra.mxu0 0.0
    %913 = vmatprep.subr.mxu0 0.0
    %914 = vmatpush2.msra.mxu0 0.0
    %915 = vmatprep.subr.mxu0 0.0
    %916 = vmatpush2.msra.mxu0 0.0
    %917 = vmatprep.mubr.f32.mxu0 0.0
    %918 = vmatmul.mubr.f32.gmra.mxu0 %v852
    %v919 = vpop.f32.mrf.mxu0
    %v920 = vadd.f32 0.0, %v919
    %v921 = vpop.f32.mrf.mxu0
    %922 = vdwg.mxu0
    %v924 = vrot.slane %v849, 6
    %v926 = vadd.f32 %v239, %v924
    %v927 = vmax.f32 %v920, 1e-30
    %v928 = vlog2.pop %v927
    %v929 = vmul.f32 %v928, 0.6931472
    %v931 = vrot.slane %v929, 6
    %v933 = vadd.f32 %v926, %v931
    %vm934 = vcmp.gt.s32.totalorder %v467, 5
    %v935 = vsel %vm934, 1, 0
    %936 = vset.pattern.permute.xlu0 0
    %937 = vperm.xlu0 %936, %v935
    %v938 = vpop.permute.xlu0 %937
    %vm939 = vcmp.eq.s32.totalorder %v938, 1
    %v941 = vrot.slane %v933, 2
    %v943 = vsel %vm939, %v941, %v846
    %v944 = vsel %vm381, %v943, -inf
    %945 = vmax.xlane.f32.xlu0 %v944
    %v946 = vpop.xlane.xlu0 %945
    %v947 = vsub.f32 %v943, %v946
    %v948 = vmul.f32 %v947, 1.442695
    %v949 = vpow.pop %v948
    %950 = vmatprep.subr.mxu0 0.0
    %951 = vmatpush1.msra.mxu0 %v466
    %952 = vmatprep.subr.mxu0 0.0
    %953 = vmatpush1.msra.mxu0 %v464
    %954 = vmatprep.subr.mxu0 0.0
    %955 = vmatpush1.msra.mxu0 %v462
    %956 = vmatprep.subr.mxu0 0.0
    %957 = vmatpush1.msra.mxu0 %v460
    %958 = vmatprep.subr.mxu0 0.0
    %959 = vmatpush1.msra.mxu0 %v458
    %960 = vmatprep.subr.mxu0 0.0
    %961 = vmatpush1.msra.mxu0 %v456
    %962 = vmatprep.subr.mxu0 0.0
    %963 = vmatpush1.msra.mxu0 %v454
    %964 = vmatprep.subr.mxu0 0.0
    %965 = vmatpush1.msra.mxu0 %v452
    %966 = vmatprep.subr.mxu0 0.0
    %967 = vmatpush1.msra.mxu0 %v450
    %968 = vmatprep.subr.mxu0 0.0
    %969 = vmatpush1.msra.mxu0 %v448
    %970 = vmatprep.subr.mxu0 0.0
    %971 = vmatpush1.msra.mxu0 %v446
    %972 = vmatprep.subr.mxu0 0.0
    %973 = vmatpush1.msra.mxu0 %v444
    %974 = vmatprep.subr.mxu0 0.0
    %975 = vmatpush1.msra.mxu0 %v442
    %976 = vmatprep.subr.mxu0 0.0
    %977 = vmatpush1.msra.mxu0 %v440
    %978 = vmatprep.subr.mxu0 0.0
    %979 = vmatpush1.msra.mxu0 %v438
    %980 = vmatprep.subr.mxu0 0.0
    %981 = vmatpush1.msra.mxu0 %v436
    %982 = vmatprep.subr.mxu0 0.0
    %983 = vmatpush2.msra.mxu0 0.0
    %984 = vmatprep.subr.mxu0 0.0
    %985 = vmatpush2.msra.mxu0 0.0
    %986 = vmatprep.subr.mxu0 0.0
    %987 = vmatpush2.msra.mxu0 0.0
    %988 = vmatprep.subr.mxu0 0.0
    %989 = vmatpush2.msra.mxu0 0.0
    %990 = vmatprep.subr.mxu0 0.0
    %991 = vmatpush2.msra.mxu0 0.0
    %992 = vmatprep.subr.mxu0 0.0
    %993 = vmatpush2.msra.mxu0 0.0
    %994 = vmatprep.subr.mxu0 0.0
    %995 = vmatpush2.msra.mxu0 0.0
    %996 = vmatprep.subr.mxu0 0.0
    %997 = vmatpush2.msra.mxu0 0.0
    %998 = vmatprep.subr.mxu0 0.0
    %999 = vmatpush2.msra.mxu0 0.0
    %1000 = vmatprep.subr.mxu0 0.0
    %1001 = vmatpush2.msra.mxu0 0.0
    %1002 = vmatprep.subr.mxu0 0.0
    %1003 = vmatpush2.msra.mxu0 0.0
    %1004 = vmatprep.subr.mxu0 0.0
    %1005 = vmatpush2.msra.mxu0 0.0
    %1006 = vmatprep.subr.mxu0 0.0
    %1007 = vmatpush2.msra.mxu0 0.0
    %1008 = vmatprep.subr.mxu0 0.0
    %1009 = vmatpush2.msra.mxu0 0.0
    %1010 = vmatprep.subr.mxu0 0.0
    %1011 = vmatpush2.msra.mxu0 0.0
    %1012 = vmatprep.subr.mxu0 0.0
    %1013 = vmatpush2.msra.mxu0 0.0
    %1014 = vmatprep.mubr.f32.mxu0 0.0
    %1015 = vmatmul.mubr.f32.gmra.mxu0 %v949
    %v1016 = vpop.f32.mrf.mxu0
    %v1017 = vadd.f32 0.0, %v1016
    %v1018 = vpop.f32.mrf.mxu0
    %1019 = vdwg.mxu0
    %v1021 = vrot.slane %v946, 4
    %v1023 = vadd.f32 %v239, %v1021
    %v1024 = vmax.f32 %v1017, 1e-30
    %v1025 = vlog2.pop %v1024
    %v1026 = vmul.f32 %v1025, 0.6931472
    %v1028 = vrot.slane %v1026, 4
    %v1030 = vadd.f32 %v1023, %v1028
    %vm1031 = vcmp.gt.s32.totalorder %v467, 6
    %v1032 = vsel %vm1031, 1, 0
    %1033 = vset.pattern.permute.xlu0 0
    %1034 = vperm.xlu0 %1033, %v1032
    %v1035 = vpop.permute.xlu0 %1034
    %vm1036 = vcmp.eq.s32.totalorder %v1035, 1
    %v1038 = vrot.slane %v1030, 4
    %v1040 = vsel %vm1036, %v1038, %v943
    %v1041 = vsel %vm381, %v1040, -inf
    %1042 = vmax.xlane.f32.xlu0 %v1041
    %v1043 = vpop.xlane.xlu0 %1042
    %v1044 = vsub.f32 %v1040, %v1043
    %v1045 = vmul.f32 %v1044, 1.442695
    %v1046 = vpow.pop %v1045
    %1047 = vmatprep.subr.mxu0 0.0
    %1048 = vmatpush1.msra.mxu0 %v466
    %1049 = vmatprep.subr.mxu0 0.0
    %1050 = vmatpush1.msra.mxu0 %v464
    %1051 = vmatprep.subr.mxu0 0.0
    %1052 = vmatpush1.msra.mxu0 %v462
    %1053 = vmatprep.subr.mxu0 0.0
    %1054 = vmatpush1.msra.mxu0 %v460
    %1055 = vmatprep.subr.mxu0 0.0
    %1056 = vmatpush1.msra.mxu0 %v458
    %1057 = vmatprep.subr.mxu0 0.0
    %1058 = vmatpush1.msra.mxu0 %v456
    %1059 = vmatprep.subr.mxu0 0.0
    %1060 = vmatpush1.msra.mxu0 %v454
    %1061 = vmatprep.subr.mxu0 0.0
    %1062 = vmatpush1.msra.mxu0 %v452
    %1063 = vmatprep.subr.mxu0 0.0
    %1064 = vmatpush1.msra.mxu0 %v450
    %1065 = vmatprep.subr.mxu0 0.0
    %1066 = vmatpush1.msra.mxu0 %v448
    %1067 = vmatprep.subr.mxu0 0.0
    %1068 = vmatpush1.msra.mxu0 %v446
    %1069 = vmatprep.subr.mxu0 0.0
    %1070 = vmatpush1.msra.mxu0 %v444
    %1071 = vmatprep.subr.mxu0 0.0
    %1072 = vmatpush1.msra.mxu0 %v442
    %1073 = vmatprep.subr.mxu0 0.0
    %1074 = vmatpush1.msra.mxu0 %v440
    %1075 = vmatprep.subr.mxu0 0.0
    %1076 = vmatpush1.msra.mxu0 %v438
    %1077 = vmatprep.subr.mxu0 0.0
    %1078 = vmatpush1.msra.mxu0 %v436
    %1079 = vmatprep.subr.mxu0 0.0
    %1080 = vmatpush2.msra.mxu0 0.0
    %1081 = vmatprep.subr.mxu0 0.0
    %1082 = vmatpush2.msra.mxu0 0.0
    %1083 = vmatprep.subr.mxu0 0.0
    %1084 = vmatpush2.msra.mxu0 0.0
    %1085 = vmatprep.subr.mxu0 0.0
    %1086 = vmatpush2.msra.mxu0 0.0
    %1087 = vmatprep.subr.mxu0 0.0
    %1088 = vmatpush2.msra.mxu0 0.0
    %1089 = vmatprep.subr.mxu0 0.0
    %1090 = vmatpush2.msra.mxu0 0.0
    %1091 = vmatprep.subr.mxu0 0.0
    %1092 = vmatpush2.msra.mxu0 0.0
    %1093 = vmatprep.subr.mxu0 0.0
    %1094 = vmatpush2.msra.mxu0 0.0
    %1095 = vmatprep.subr.mxu0 0.0
    %1096 = vmatpush2.msra.mxu0 0.0
    %1097 = vmatprep.subr.mxu0 0.0
    %1098 = vmatpush2.msra.mxu0 0.0
    %1099 = vmatprep.subr.mxu0 0.0
    %1100 = vmatpush2.msra.mxu0 0.0
    %1101 = vmatprep.subr.mxu0 0.0
    %1102 = vmatpush2.msra.mxu0 0.0
    %1103 = vmatprep.subr.mxu0 0.0
    %1104 = vmatpush2.msra.mxu0 0.0
    %1105 = vmatprep.subr.mxu0 0.0
    %1106 = vmatpush2.msra.mxu0 0.0
    %1107 = vmatprep.subr.mxu0 0.0
    %1108 = vmatpush2.msra.mxu0 0.0
    %1109 = vmatprep.subr.mxu0 0.0
    %1110 = vmatpush2.msra.mxu0 0.0
    %1111 = vmatprep.mubr.f32.mxu0 0.0
    %1112 = vmatmul.mubr.f32.gmra.mxu0 %v1046
    %v1113 = vpop.f32.mrf.mxu0
    %v1114 = vadd.f32 0.0, %v1113
    %v1115 = vpop.f32.mrf.mxu0
    %1116 = vdwg.mxu0
    %v1118 = vrot.slane %v1043, 2
    %v1120 = vadd.f32 %v239, %v1118
    %v1121 = vmax.f32 %v1114, 1e-30
    %v1122 = vlog2.pop %v1121
    %v1123 = vmul.f32 %v1122, 0.6931472
    %v1125 = vrot.slane %v1123, 2
    %v1127 = vadd.f32 %v1120, %v1125
    %vm1128 = vcmp.gt.s32.totalorder %v467, 7
    %v1129 = vsel %vm1128, 1, 0
    %1130 = vset.pattern.permute.xlu0 0
    %1131 = vperm.xlu0 %1130, %v1129
    %v1132 = vpop.permute.xlu0 %1131
    %vm1133 = vcmp.eq.s32.totalorder %v1132, 1
    %v1135 = vrot.slane %v1127, 6
    %v1137 = vsel %vm1133, %v1135, %v1040
    %v1138 = vadd.f32 %v1137, %v421
    %v1139 = vsel %vm381, %v1138, -inf
    %1140 = vmax.xlane.f32.xlu0 %v1139
    %v1141 = vpop.xlane.xlu0 %1140
    %vm1142 = vcmask 1024
    %v1143 = vsel %vm1142, %v1141, 0.0
    %1144 = vadd.xlane.f32.xlu0 %v1143
    %v1145 = vpop.xlane.xlu0 %1144
    %v1146 = vrot.slane %v1145, 4
    %v1147 = vadd.f32 %v1145, %v1146
    %v1148 = vrot.slane %v1147, 2
    %v1149 = vadd.f32 %v1147, %v1148
    %v1150 = vrot.slane %v1149, 1
    %v1151 = vadd.f32 %v1149, %v1150
    %s1152 = vtos %v1151
    %v1153 = vsub.f32 %v1138, %v1141
    %v1154 = vmul.f32 %v1153, 1.442695
    %v1155 = vpow.pop %v1154
    %v1156 = vsel %vm381, %v1155, 0.0
    %1157 = vadd.xlane.f32.xlu0 %v1156
    %v1158 = vpop.xlane.xlu0 %1157
    %v1159 = vlog2.pop %v1158
    %v1160 = vmul.f32 %v1159, 0.6931472
    %v1161 = vsel %vm1142, %v1160, 0.0
    %1162 = vadd.xlane.f32.xlu0 %v1161
    %v1163 = vpop.xlane.xlu0 %1162
    %v1164 = vrot.slane %v1163, 4
    %v1165 = vadd.f32 %v1163, %v1164
    %v1166 = vrot.slane %v1165, 2
    %v1167 = vadd.f32 %v1165, %v1166
    %v1168 = vrot.slane %v1167, 1
    %v1169 = vadd.f32 %v1167, %v1168
    %s1170 = vtos %v1169
    %s1171 = sadd.f32 %s1152, %s1170
    %s1172 = ssub.f32 %s434, %s1171
    %s1173 = ssub.f32 0.0, %s1172
    %v1174 = vrcp.pop 2.0
    %s1175 = vtos %v1174
    %s1176 = smul.f32 %s1173, %s1175
    %s1177 = scalar_lea.smem [#allocation2], 0
    %1178 = sst [smem:[%s1177]] %s1176
    // Predicated region
    $region54: #{crf_model_forward.1} parent=1 // pred_check
      _
    $region55: #{crf_model_forward.1} parent=1 // pred_check_branch
      %1180 = sbr.rel (0) target = $region57
    $region56: #{crf_model_forward.1} parent=1 // pred_region
      _
    $region57: #{crf_model_forward.1} parent=1 // pred_fallthru
      _
    // Predicated region
    $region58: #{crf_model_forward.1} parent=1 // pred_check
      _
    $region59: #{crf_model_forward.1} parent=1 // pred_check_branch
      %1182 = sbr.rel (0) target = $region61
    $region60: #{crf_model_forward.1} parent=1 // pred_region
      %s1184 = ssub.s32 16, 16
      %1185 = vsyncadd [#allocation3], %s1184
      %1188 = dma.smem_to_hbm [#allocation2], 16, %s14, [#allocation3]
    $region61: #{crf_model_forward.1} parent=1 // pred_fallthru
      _
    // Predicated region
    $region62: #{crf_model_forward.1} parent=1 // pred_check
      _
    $region63: #{crf_model_forward.1} parent=1 // pred_check_branch
      %1190 = sbr.rel (0) target = $region65
    $region64: #{crf_model_forward.1} parent=1 // pred_region
      _
    $region65: #{crf_model_forward.1} parent=1 // pred_fallthru
      _
    // Predicated region
    $region66: #{crf_model_forward.1} parent=1 // pred_check
      _
    $region67: #{crf_model_forward.1} parent=1 // pred_check_branch
      %1192 = sbr.rel (0) target = $region69
    $region68: #{crf_model_forward.1} parent=1 // pred_region
      %1193 = dma.done [#allocation3], 16
    $region69: #{crf_model_forward.1} parent=1 // pred_fallthru
      _
    %1194 = sfence
    %1195 = vsyncpa [#allocation3], 1

</llo_original>
